<compile_context>
chip_gen: v6e
topology: v6e:2x2x1
jax: 0.10.0
libtpu: 0.0.40
codegen_flags: <defaults>
</compile_context>

<pallas_src>
import functools

import jax
import jax.numpy as jnp
from jax.experimental import pallas as pl
from jax.experimental.pallas import tpu as pltpu


# ----------------------------------------------------------------------------
# The fused kernel: one grid step == one batch element.
# ----------------------------------------------------------------------------
def _stock_block_kernel(x_ref,        # (1, N, T)
                        mull_ref,     # (K*N, N)   K folded into rows
                        wd_ref,       # (4, T, 2D) DFT-folded layer-0 GLU weights
                        b0_ref,       # (2, 1, 2D) layer-0 biases (real, imag)
                        gw12_ref,     # (4, D, 2D) GLU layers 1,2 (real/imag), L|R concat
                        gb12_ref,     # (4, 1, 2D)
                        wreal_ref,    # (D, mt)    irfft+sum_k folded (real stream)
                        wimag_ref,    # (D, mt)    irfft+sum_k folded (imag stream)
                        wf_ref, bf_ref,    # forecast:        (mt, mt), (1, mt)
                        wfr_ref, bfr_ref,  # forecast_result: (mt, T),  (1, T)
                        wb_ref, bb_ref,    # backcast:        (mt, T),  (1, T)
                        wbs_ref, bbs_ref,  # backcast_short:  (T, T),   (1, T)
                        fore_ref,     # (1, N, T)
                        back_ref):    # (1, N, T)
    N = x_ref.shape[1]
    D = wreal_ref.shape[0]            # 4 * mt (GLU feature width)

    x = x_ref[0]                                                        # (N, T)

    # Graph conv, K folded into the row axis: (K*N, N) @ (N, T).
    gf = jnp.dot(mull_ref[...], x, preferred_element_type=jnp.float32)  # (4N, T)
    a0 = gf[0 * N:1 * N]
    a1 = gf[1 * N:2 * N]
    a2 = gf[2 * N:3 * N]
    a3 = gf[3 * N:4 * N]

    # Length-4 DFT along the Chebyshev axis + layer-0 GLU linear, folded into
    # the host-precomputed (T, 2D) matrices wd[0..3]  (see _prepare_packed).
    z_r = (jnp.dot(a0, wd_ref[0], preferred_element_type=jnp.float32)
           + jnp.dot(a1 + a3, wd_ref[1], preferred_element_type=jnp.float32)
           + jnp.dot(a2, wd_ref[2], preferred_element_type=jnp.float32)
           + b0_ref[0])
    z_i = jnp.dot(a3 - a1, wd_ref[3], preferred_element_type=jnp.float32) + b0_ref[1]

    real = z_r[:, :D] * jax.nn.sigmoid(z_r[:, D:])                      # (N, D)
    imag = z_i[:, :D] * jax.nn.sigmoid(z_i[:, D:])                      # (N, D)

    # GLU layers 1 and 2 for both streams; left|right weights pre-concatenated.
    def glu(v, w, b):
        z = jnp.dot(v, w, preferred_element_type=jnp.float32) + b
        return z[:, :D] * jax.nn.sigmoid(z[:, D:])

    real = glu(real, gw12_ref[0], gb12_ref[0])
    imag = glu(imag, gw12_ref[1], gb12_ref[1])
    real = glu(real, gw12_ref[2], gb12_ref[2])
    imag = glu(imag, gw12_ref[3], gb12_ref[3])

    # irfft(n=4) over the Chebyshev axis + sum_k(. @ weight[k]) folded into two
    # contraction-128 matmuls (wreal / wimag precomputed on the host).
    ig = (jnp.dot(real, wreal_ref[...], preferred_element_type=jnp.float32)
          + jnp.dot(imag, wimag_ref[...], preferred_element_type=jnp.float32))  # (N, mt)

    # Heads.
    fsrc = jax.nn.sigmoid(
        jnp.dot(ig, wf_ref[...], preferred_element_type=jnp.float32) + bf_ref[...])
    fore = jnp.dot(fsrc, wfr_ref[...], preferred_element_type=jnp.float32) + bfr_ref[...]
    bshort = jnp.dot(x, wbs_ref[...], preferred_element_type=jnp.float32) + bbs_ref[...]
    bpre = jnp.dot(ig, wb_ref[...], preferred_element_type=jnp.float32) + bb_ref[...]

    fore_ref[0] = fore
    back_ref[0] = jax.nn.sigmoid(bpre - bshort)


# ----------------------------------------------------------------------------
# Host-side weight packing (tiny jnp ops; folds DFT/irfft into weight matrices).
# ----------------------------------------------------------------------------
def _prepare_packed(params, time_step):
    T = time_step
    glus = params["glu"]

    def lr_cat(i):
        wl, bl, wr, br = glus[i]
        return (jnp.concatenate([wl, wr], axis=1),
                jnp.concatenate([bl, br])[None, :])

    w0r, b0r = lr_cat(0)          # (4T, 2D) real stream, layer 0
    w0i, b0i = lr_cat(1)          # (4T, 2D) imag stream, layer 0

    # Fold the length-4 forward DFT (blocks of width T on the input axis) into
    # the layer-0 weights. With a_k the Chebyshev components:
    #   real_in = [a0+a1+a2+a3 | a0-a2 | a0-a1+a2-a3 | a0-a2]
    #   imag_in = [0 | a3-a1 | 0 | a1-a3]
    # so  real_in @ w0r = a0@wdA + (a1+a3)@wdB + a2@wdC,  imag_in @ w0i = (a3-a1)@wdI.
    blk = lambda m, k: m[k * T:(k + 1) * T]
    wdA = blk(w0r, 0) + blk(w0r, 1) + blk(w0r, 2) + blk(w0r, 3)
    wdB = blk(w0r, 0) - blk(w0r, 2)
    wdC = blk(w0r, 0) - blk(w0r, 1) + blk(w0r, 2) - blk(w0r, 3)
    wdI = blk(w0i, 1) - blk(w0i, 3)
    wd = jnp.stack([wdA, wdB, wdC, wdI])                      # (4, T, 2D)
    b0 = jnp.stack([b0r, b0i])                                # (2, 1, 2D)

    w1r, b1r = lr_cat(2)
    w1i, b1i = lr_cat(3)
    w2r, b2r = lr_cat(4)
    w2i, b2i = lr_cat(5)
    gw12 = jnp.stack([w1r, w1i, w2r, w2i])                    # (4, D, 2D)
    gb12 = jnp.stack([b1r, b1i, b2r, b2i])                    # (4, 1, 2D)

    # Fold torch.fft.irfft(n=4, dim=k) followed by sum_k(. @ weight[k]) into
    # (4*mt, mt) matrices. With R_k / I_k the spectral blocks after the GLUs:
    #   y0=(R0+2R1+R2)/4  y1=(R0-R2-2I1)/4  y2=(R0-2R1+R2)/4  y3=(R0-R2+2I1)/4
    #   ig = sum_m y_m @ W_m  =  real_out @ wreal + imag_out @ wimag
    Wk = params["weight"]                                     # (4, mt, mt)
    W0, W1, W2, W3 = Wk[0], Wk[1], Wk[2], Wk[3]
    zeros = jnp.zeros_like(W0)
    wreal = jnp.concatenate([(W0 + W1 + W2 + W3) * 0.25,
                             (W0 - W2) * 0.5,
                             (W0 - W1 + W2 - W3) * 0.25,
                             zeros], axis=0)                  # (4mt, mt)
    wimag = jnp.concatenate([zeros, (W3 - W1) * 0.5, zeros, zeros], axis=0)

    wf, bf = params["forecast"]
    wfr, bfr = params["forecast_result"]
    wb, bb = params["backcast"]
    wbs, bbs = params["backcast_short_cut"]
    return dict(wd=wd, b0=b0, gw12=gw12, gb12=gb12, wreal=wreal, wimag=wimag,
                wf=wf, bf=bf[None, :], wfr=wfr, bfr=bfr[None, :],
                wb=wb, bb=bb[None, :], wbs=wbs, bbs=bbs[None, :])


# ----------------------------------------------------------------------------
# Full StockBlockLayer forward (stack_cnt == 0 branch)
# ----------------------------------------------------------------------------
def stock_block_forward(params, x, mul_L, *, time_step, multi, stack_cnt=0):
    B, N, T = x.shape
    K = mul_L.shape[0]
    packed = _prepare_packed(params, time_step)
    mull_flat = mul_L.reshape(K * N, N)

    args = [x, mull_flat, packed["wd"], packed["b0"], packed["gw12"], packed["gb12"],
            packed["wreal"], packed["wimag"], packed["wf"], packed["bf"],
            packed["wfr"], packed["bfr"], packed["wb"], packed["bb"],
            packed["wbs"], packed["bbs"]]

    in_specs = [pl.BlockSpec((1, N, T), lambda b: (b, 0, 0))]
    for a in args[1:]:
        in_specs.append(pl.BlockSpec(a.shape, lambda b, _nd=a.ndim: (0,) * _nd))

    forecast, backcast = pl.pallas_call(
        _stock_block_kernel,
        out_shape=(jax.ShapeDtypeStruct((B, N, T), jnp.float32),
                   jax.ShapeDtypeStruct((B, N, T), jnp.float32)),
        grid=(B,),
        in_specs=in_specs,
        out_specs=(pl.BlockSpec((1, N, T), lambda b: (b, 0, 0)),
                   pl.BlockSpec((1, N, T), lambda b: (b, 0, 0))),
        compiler_params=pltpu.CompilerParams(
            dimension_semantics=("parallel",),          # v7x: batch across the 2 TCs
            vmem_limit_bytes=16 * 1024 * 1024),
    )(*args)

    backcast_source = backcast[:, None, :, :] if stack_cnt == 0 else None
    return forecast, backcast_source


# ----------------------------------------------------------------------------
# Parameter init (deterministic, synthetic — matches the torch module's shapes)
# ----------------------------------------------------------------------------
def init_params(key, time_step, multi):
    T = time_step
    mt = T * multi
    oc = 4 * multi  # output_channel
    keys = iter(jax.random.split(key, 40))

    def lin(din, dout):
        w = jax.random.normal(next(keys), (din, dout), jnp.float32) * (1.0 / din) ** 0.5
        b = jax.random.normal(next(keys), (dout,), jnp.float32) * 0.01
        return w, b

    glu_dims = [(4 * T, T * oc), (4 * T, T * oc),
                (T * oc, T * oc), (T * oc, T * oc),
                (T * oc, T * oc), (T * oc, T * oc)]
    glus = []
    for din, dout in glu_dims:
        wl, bl = lin(din, dout)
        wr, br = lin(din, dout)
        glus.append((wl, bl, wr, br))

    xavier_std = (2.0 / (mt + mt)) ** 0.5
    params = {
        # torch shape (1, 4, 1, mt, mt) -> squeezed to (4, mt, mt)
        "weight": jax.random.normal(next(keys), (4, mt, mt), jnp.float32) * xavier_std,
        "glu": glus,
        "forecast": lin(mt, mt),
        "forecast_result": lin(mt, T),
        "backcast": lin(mt, T),
        "backcast_short_cut": lin(T, T),
    }
    return params


# ----------------------------------------------------------------------------
# Pure-JAX reference (follows the torch code structure; C2R irfft semantics)
# ----------------------------------------------------------------------------
def _reference_forward(params, x, mul_L, *, time_step, multi):
    B, N, T = x.shape
    mt = time_step * multi
    gfted = jnp.einsum("knm,bmt->bknt", mul_L, x)               # (B, 4, N, T)
    ffted = jnp.fft.fft(gfted, axis=1)
    real = jnp.transpose(ffted.real, (0, 2, 1, 3)).reshape(B, N, 4 * T)
    imag = jnp.transpose(ffted.imag, (0, 2, 1, 3)).reshape(B, N, 4 * T)

    def glu_ref(v, p):
        wl, bl, wr, br = p
        return (v @ wl + bl) * jax.nn.sigmoid(v @ wr + br)

    for i in range(3):
        real = glu_ref(real, params["glu"][2 * i])
        imag = glu_ref(imag, params["glu"][2 * i + 1])

    real4 = real.reshape(B, N, 4, mt).transpose(0, 2, 1, 3)     # (B, 4, N, mt)
    imag4 = imag.reshape(B, N, 4, mt).transpose(0, 2, 1, 3)
    spec = (real4 + 1j * imag4)[:, :3]                          # one-sided (n//2+1)
    full = jnp.concatenate([spec, jnp.conj(spec[:, 1:2])], axis=1)
    iffted = jnp.fft.ifft(full, axis=1).real.astype(jnp.float32)  # == irfft(n=4)

    ig = jnp.einsum("bknm,kmp->bnp", iffted, params["weight"])
    wf, bf = params["forecast"]
    wfr, bfr = params["forecast_result"]
    wb, bb = params["backcast"]
    wbs, bbs = params["backcast_short_cut"]
    fsrc = jax.nn.sigmoid(ig @ wf + bf)
    forecast = fsrc @ wfr + bfr
    backcast = jax.nn.sigmoid(ig @ wb + bb - (x @ wbs + bbs))
    return forecast, backcast[:, None, :, :]


# ----------------------------------------------------------------------------
if __name__ == "__main__":
    B, N, T, multi = 2, 16, 8, 4  # batch, node_cnt (unit), time_step, multi_layer

    key = jax.random.PRNGKey(0)
    kx, kl, kp = jax.random.split(key, 3)
    x = jax.random.normal(kx, (B, N, T), jnp.float32)
    mul_L = jax.random.normal(kl, (4, N, N), jnp.float32) * 0.1  # (K=3+1, N, N)
    params = init_params(kp, T, multi)

    fwd = jax.jit(functools.partial(stock_block_forward,
                                    time_step=T, multi=multi, stack_cnt=0))
    forecast, backcast = fwd(params, x, mul_L)
    jax.block_until_ready((forecast, backcast))

    assert forecast.shape == (B, N, T), forecast.shape
    assert backcast.shape == (B, 1, N, T), backcast.shape
    assert forecast.dtype == jnp.float32 and backcast.dtype == jnp.float32

    # Numerical check against a pure-JAX reference that mirrors the torch code.
    with jax.default_matmul_precision("float32"):
        ref_fc, ref_bc = _reference_forward(params, x, mul_L, time_step=T, multi=multi)
    err_fc = float(jnp.max(jnp.abs(forecast - ref_fc)))
    err_bc = float(jnp.max(jnp.abs(backcast - ref_bc)))
    assert err_fc < 5e-3 and err_bc < 5e-3, (err_fc, err_bc)

    print("KERNEL_OK")
</pallas_src>

<mosaic_0001>
module attributes {stable_mosaic.version = 11 : i64} {
  func.func @_stock_block_kernel(%arg0: i32, %arg1: memref<1x16x8xf32, #tpu.memory_space<vmem>>, %arg2: memref<64x16xf32, #tpu.memory_space<vmem>>, %arg3: memref<4x8x256xf32, #tpu.memory_space<vmem>>, %arg4: memref<2x1x256xf32, #tpu.memory_space<vmem>>, %arg5: memref<4x128x256xf32, #tpu.memory_space<vmem>>, %arg6: memref<4x1x256xf32, #tpu.memory_space<vmem>>, %arg7: memref<128x32xf32, #tpu.memory_space<vmem>>, %arg8: memref<128x32xf32, #tpu.memory_space<vmem>>, %arg9: memref<32x32xf32, #tpu.memory_space<vmem>>, %arg10: memref<1x32xf32, #tpu.memory_space<vmem>>, %arg11: memref<32x8xf32, #tpu.memory_space<vmem>>, %arg12: memref<1x8xf32, #tpu.memory_space<vmem>>, %arg13: memref<32x8xf32, #tpu.memory_space<vmem>>, %arg14: memref<1x8xf32, #tpu.memory_space<vmem>>, %arg15: memref<8x8xf32, #tpu.memory_space<vmem>>, %arg16: memref<1x8xf32, #tpu.memory_space<vmem>>, %arg17: memref<1x16x8xf32, #tpu.memory_space<vmem>>, %arg18: memref<1x16x8xf32, #tpu.memory_space<vmem>>) attributes {dimension_semantics = [#tpu.dimension_semantics<parallel>], iteration_bounds = array<i64: 2>, scalar_prefetch = 0 : i64, scratch_operands = 0 : i64, tpu.core_type = #tpu.core_type<tc>, window_params = [{transform_indices = @transform_0, window_bounds = array<i64: 1, 16, 8>}, {pipeline_mode = #tpu.pipeline_mode<synchronous>, transform_indices = @transform_1, window_bounds = array<i64: 64, 16>}, {pipeline_mode = #tpu.pipeline_mode<synchronous>, transform_indices = @transform_2, window_bounds = array<i64: 4, 8, 256>}, {pipeline_mode = #tpu.pipeline_mode<synchronous>, transform_indices = @transform_3, window_bounds = array<i64: 2, 1, 256>}, {pipeline_mode = #tpu.pipeline_mode<synchronous>, transform_indices = @transform_4, window_bounds = array<i64: 4, 128, 256>}, {pipeline_mode = #tpu.pipeline_mode<synchronous>, transform_indices = @transform_5, window_bounds = array<i64: 4, 1, 256>}, {pipeline_mode = #tpu.pipeline_mode<synchronous>, transform_indices = @transform_6, window_bounds = array<i64: 128, 32>}, {pipeline_mode = #tpu.pipeline_mode<synchronous>, transform_indices = @transform_7, window_bounds = array<i64: 128, 32>}, {pipeline_mode = #tpu.pipeline_mode<synchronous>, transform_indices = @transform_8, window_bounds = array<i64: 32, 32>}, {pipeline_mode = #tpu.pipeline_mode<synchronous>, transform_indices = @transform_9, window_bounds = array<i64: 1, 32>}, {pipeline_mode = #tpu.pipeline_mode<synchronous>, transform_indices = @transform_10, window_bounds = array<i64: 32, 8>}, {pipeline_mode = #tpu.pipeline_mode<synchronous>, transform_indices = @transform_11, window_bounds = array<i64: 1, 8>}, {pipeline_mode = #tpu.pipeline_mode<synchronous>, transform_indices = @transform_12, window_bounds = array<i64: 32, 8>}, {pipeline_mode = #tpu.pipeline_mode<synchronous>, transform_indices = @transform_13, window_bounds = array<i64: 1, 8>}, {pipeline_mode = #tpu.pipeline_mode<synchronous>, transform_indices = @transform_14, window_bounds = array<i64: 8, 8>}, {pipeline_mode = #tpu.pipeline_mode<synchronous>, transform_indices = @transform_15, window_bounds = array<i64: 1, 8>}, {transform_indices = @transform_16, window_bounds = array<i64: 1, 16, 8>}, {transform_indices = @transform_17, window_bounds = array<i64: 1, 16, 8>}]} {
    %c0 = arith.constant 0 : index
    %c0_0 = arith.constant 0 : index
    %c0_1 = arith.constant 0 : index
    %0 = vector.load %arg1[%c0, %c0_0, %c0_1] : memref<1x16x8xf32, #tpu.memory_space<vmem>>, vector<1x16x8xf32>
    %1 = vector.shape_cast %0 : vector<1x16x8xf32> to vector<16x8xf32>
    %c0_2 = arith.constant 0 : index
    %c0_3 = arith.constant 0 : index
    %2 = vector.load %arg2[%c0_2, %c0_3] : memref<64x16xf32, #tpu.memory_space<vmem>>, vector<64x16xf32>
    %cst = arith.constant dense<0.000000e+00> : vector<64x8xf32>
    %3 = tpu.matmul %2, %1, %cst {dimension_numbers = #tpu.dot_dimension_numbers<[1], [0], [0], [1], [0, 0, 1, 1], [], []>} : vector<64x16xf32>, vector<16x8xf32>, vector<64x8xf32> -> vector<64x8xf32>
    %4 = vector.extract_strided_slice %3 {offsets = [0, 0], sizes = [16, 8], strides = [1, 1]} : vector<64x8xf32> to vector<16x8xf32>
    %5 = vector.extract_strided_slice %3 {offsets = [16, 0], sizes = [16, 8], strides = [1, 1]} : vector<64x8xf32> to vector<16x8xf32>
    %6 = vector.extract_strided_slice %3 {offsets = [32, 0], sizes = [16, 8], strides = [1, 1]} : vector<64x8xf32> to vector<16x8xf32>
    %7 = vector.extract_strided_slice %3 {offsets = [48, 0], sizes = [16, 8], strides = [1, 1]} : vector<64x8xf32> to vector<16x8xf32>
    %c0_4 = arith.constant 0 : index
    %c0_5 = arith.constant 0 : index
    %c0_6 = arith.constant 0 : index
    %8 = vector.load %arg3[%c0_4, %c0_5, %c0_6] : memref<4x8x256xf32, #tpu.memory_space<vmem>>, vector<1x8x256xf32>
    %9 = vector.shape_cast %8 : vector<1x8x256xf32> to vector<8x256xf32>
    %cst_7 = arith.constant dense<0.000000e+00> : vector<16x256xf32>
    %10 = tpu.matmul %4, %9, %cst_7 {dimension_numbers = #tpu.dot_dimension_numbers<[1], [0], [0], [1], [0, 0, 1, 1], [], []>} : vector<16x8xf32>, vector<8x256xf32>, vector<16x256xf32> -> vector<16x256xf32>
    %11 = arith.addf %5, %7 : vector<16x8xf32>
    %c1 = arith.constant 1 : index
    %c0_8 = arith.constant 0 : index
    %c0_9 = arith.constant 0 : index
    %12 = vector.load %arg3[%c1, %c0_8, %c0_9] : memref<4x8x256xf32, #tpu.memory_space<vmem>>, vector<1x8x256xf32>
    %13 = vector.shape_cast %12 : vector<1x8x256xf32> to vector<8x256xf32>
    %cst_10 = arith.constant dense<0.000000e+00> : vector<16x256xf32>
    %14 = tpu.matmul %11, %13, %cst_10 {dimension_numbers = #tpu.dot_dimension_numbers<[1], [0], [0], [1], [0, 0, 1, 1], [], []>} : vector<16x8xf32>, vector<8x256xf32>, vector<16x256xf32> -> vector<16x256xf32>
    %15 = arith.addf %10, %14 : vector<16x256xf32>
    %c2 = arith.constant 2 : index
    %c0_11 = arith.constant 0 : index
    %c0_12 = arith.constant 0 : index
    %16 = vector.load %arg3[%c2, %c0_11, %c0_12] : memref<4x8x256xf32, #tpu.memory_space<vmem>>, vector<1x8x256xf32>
    %17 = vector.shape_cast %16 : vector<1x8x256xf32> to vector<8x256xf32>
    %cst_13 = arith.constant dense<0.000000e+00> : vector<16x256xf32>
    %18 = tpu.matmul %6, %17, %cst_13 {dimension_numbers = #tpu.dot_dimension_numbers<[1], [0], [0], [1], [0, 0, 1, 1], [], []>} : vector<16x8xf32>, vector<8x256xf32>, vector<16x256xf32> -> vector<16x256xf32>
    %19 = arith.addf %15, %18 : vector<16x256xf32>
    %c0_14 = arith.constant 0 : index
    %c0_15 = arith.constant 0 : index
    %c0_16 = arith.constant 0 : index
    %20 = vector.load %arg4[%c0_14, %c0_15, %c0_16] : memref<2x1x256xf32, #tpu.memory_space<vmem>>, vector<1x1x256xf32>
    %21 = vector.shape_cast %20 : vector<1x1x256xf32> to vector<1x256xf32>
    %22 = vector.broadcast %21 : vector<1x256xf32> to vector<16x256xf32>
    %23 = arith.addf %19, %22 : vector<16x256xf32>
    %24 = arith.subf %7, %5 : vector<16x8xf32>
    %c3 = arith.constant 3 : index
    %c0_17 = arith.constant 0 : index
    %c0_18 = arith.constant 0 : index
    %25 = vector.load %arg3[%c3, %c0_17, %c0_18] : memref<4x8x256xf32, #tpu.memory_space<vmem>>, vector<1x8x256xf32>
    %26 = vector.shape_cast %25 : vector<1x8x256xf32> to vector<8x256xf32>
    %cst_19 = arith.constant dense<0.000000e+00> : vector<16x256xf32>
    %27 = tpu.matmul %24, %26, %cst_19 {dimension_numbers = #tpu.dot_dimension_numbers<[1], [0], [0], [1], [0, 0, 1, 1], [], []>} : vector<16x8xf32>, vector<8x256xf32>, vector<16x256xf32> -> vector<16x256xf32>
    %c1_20 = arith.constant 1 : index
    %c0_21 = arith.constant 0 : index
    %c0_22 = arith.constant 0 : index
    %28 = vector.load %arg4[%c1_20, %c0_21, %c0_22] : memref<2x1x256xf32, #tpu.memory_space<vmem>>, vector<1x1x256xf32>
    %29 = vector.shape_cast %28 : vector<1x1x256xf32> to vector<1x256xf32>
    %30 = vector.broadcast %29 : vector<1x256xf32> to vector<16x256xf32>
    %31 = arith.addf %27, %30 : vector<16x256xf32>
    %32 = vector.extract_strided_slice %23 {offsets = [0, 0], sizes = [16, 128], strides = [1, 1]} : vector<16x256xf32> to vector<16x128xf32>
    %33 = vector.extract_strided_slice %23 {offsets = [0, 128], sizes = [16, 128], strides = [1, 1]} : vector<16x256xf32> to vector<16x128xf32>
    %34 = arith.negf %33 : vector<16x128xf32>
    %35 = math.exp %34 : vector<16x128xf32>
    %cst_23 = arith.constant 1.000000e+00 : f32
    %36 = vector.broadcast %cst_23 : f32 to vector<16x128xf32>
    %37 = arith.addf %36, %35 : vector<16x128xf32>
    %38 = arith.divf %36, %37 : vector<16x128xf32>
    %39 = arith.mulf %32, %38 : vector<16x128xf32>
    %40 = vector.extract_strided_slice %31 {offsets = [0, 0], sizes = [16, 128], strides = [1, 1]} : vector<16x256xf32> to vector<16x128xf32>
    %41 = vector.extract_strided_slice %31 {offsets = [0, 128], sizes = [16, 128], strides = [1, 1]} : vector<16x256xf32> to vector<16x128xf32>
    %42 = arith.negf %41 : vector<16x128xf32>
    %43 = math.exp %42 : vector<16x128xf32>
    %cst_24 = arith.constant 1.000000e+00 : f32
    %44 = vector.broadcast %cst_24 : f32 to vector<16x128xf32>
    %45 = arith.addf %44, %43 : vector<16x128xf32>
    %46 = arith.divf %44, %45 : vector<16x128xf32>
    %47 = arith.mulf %40, %46 : vector<16x128xf32>
    %c0_25 = arith.constant 0 : index
    %c0_26 = arith.constant 0 : index
    %c0_27 = arith.constant 0 : index
    %48 = vector.load %arg5[%c0_25, %c0_26, %c0_27] : memref<4x128x256xf32, #tpu.memory_space<vmem>>, vector<1x128x256xf32>
    %49 = vector.shape_cast %48 : vector<1x128x256xf32> to vector<128x256xf32>
    %c0_28 = arith.constant 0 : index
    %c0_29 = arith.constant 0 : index
    %c0_30 = arith.constant 0 : index
    %50 = vector.load %arg6[%c0_28, %c0_29, %c0_30] : memref<4x1x256xf32, #tpu.memory_space<vmem>>, vector<1x1x256xf32>
    %51 = vector.shape_cast %50 : vector<1x1x256xf32> to vector<1x256xf32>
    %cst_31 = arith.constant dense<0.000000e+00> : vector<16x256xf32>
    %52 = tpu.matmul %39, %49, %cst_31 {dimension_numbers = #tpu.dot_dimension_numbers<[1], [0], [0], [1], [0, 0, 1, 1], [], []>} : vector<16x128xf32>, vector<128x256xf32>, vector<16x256xf32> -> vector<16x256xf32>
    %53 = vector.broadcast %51 : vector<1x256xf32> to vector<16x256xf32>
    %54 = arith.addf %52, %53 : vector<16x256xf32>
    %55 = vector.extract_strided_slice %54 {offsets = [0, 0], sizes = [16, 128], strides = [1, 1]} : vector<16x256xf32> to vector<16x128xf32>
    %56 = vector.extract_strided_slice %54 {offsets = [0, 128], sizes = [16, 128], strides = [1, 1]} : vector<16x256xf32> to vector<16x128xf32>
    %57 = arith.negf %56 : vector<16x128xf32>
    %58 = math.exp %57 : vector<16x128xf32>
    %cst_32 = arith.constant 1.000000e+00 : f32
    %59 = vector.broadcast %cst_32 : f32 to vector<16x128xf32>
    %60 = arith.addf %59, %58 : vector<16x128xf32>
    %61 = arith.divf %59, %60 : vector<16x128xf32>
    %62 = arith.mulf %55, %61 : vector<16x128xf32>
    %c1_33 = arith.constant 1 : index
    %c0_34 = arith.constant 0 : index
    %c0_35 = arith.constant 0 : index
    %63 = vector.load %arg5[%c1_33, %c0_34, %c0_35] : memref<4x128x256xf32, #tpu.memory_space<vmem>>, vector<1x128x256xf32>
    %64 = vector.shape_cast %63 : vector<1x128x256xf32> to vector<128x256xf32>
    %c1_36 = arith.constant 1 : index
    %c0_37 = arith.constant 0 : index
    %c0_38 = arith.constant 0 : index
    %65 = vector.load %arg6[%c1_36, %c0_37, %c0_38] : memref<4x1x256xf32, #tpu.memory_space<vmem>>, vector<1x1x256xf32>
    %66 = vector.shape_cast %65 : vector<1x1x256xf32> to vector<1x256xf32>
    %cst_39 = arith.constant dense<0.000000e+00> : vector<16x256xf32>
    %67 = tpu.matmul %47, %64, %cst_39 {dimension_numbers = #tpu.dot_dimension_numbers<[1], [0], [0], [1], [0, 0, 1, 1], [], []>} : vector<16x128xf32>, vector<128x256xf32>, vector<16x256xf32> -> vector<16x256xf32>
    %68 = vector.broadcast %66 : vector<1x256xf32> to vector<16x256xf32>
    %69 = arith.addf %67, %68 : vector<16x256xf32>
    %70 = vector.extract_strided_slice %69 {offsets = [0, 0], sizes = [16, 128], strides = [1, 1]} : vector<16x256xf32> to vector<16x128xf32>
    %71 = vector.extract_strided_slice %69 {offsets = [0, 128], sizes = [16, 128], strides = [1, 1]} : vector<16x256xf32> to vector<16x128xf32>
    %72 = arith.negf %71 : vector<16x128xf32>
    %73 = math.exp %72 : vector<16x128xf32>
    %cst_40 = arith.constant 1.000000e+00 : f32
    %74 = vector.broadcast %cst_40 : f32 to vector<16x128xf32>
    %75 = arith.addf %74, %73 : vector<16x128xf32>
    %76 = arith.divf %74, %75 : vector<16x128xf32>
    %77 = arith.mulf %70, %76 : vector<16x128xf32>
    %c2_41 = arith.constant 2 : index
    %c0_42 = arith.constant 0 : index
    %c0_43 = arith.constant 0 : index
    %78 = vector.load %arg5[%c2_41, %c0_42, %c0_43] : memref<4x128x256xf32, #tpu.memory_space<vmem>>, vector<1x128x256xf32>
    %79 = vector.shape_cast %78 : vector<1x128x256xf32> to vector<128x256xf32>
    %c2_44 = arith.constant 2 : index
    %c0_45 = arith.constant 0 : index
    %c0_46 = arith.constant 0 : index
    %80 = vector.load %arg6[%c2_44, %c0_45, %c0_46] : memref<4x1x256xf32, #tpu.memory_space<vmem>>, vector<1x1x256xf32>
    %81 = vector.shape_cast %80 : vector<1x1x256xf32> to vector<1x256xf32>
    %cst_47 = arith.constant dense<0.000000e+00> : vector<16x256xf32>
    %82 = tpu.matmul %62, %79, %cst_47 {dimension_numbers = #tpu.dot_dimension_numbers<[1], [0], [0], [1], [0, 0, 1, 1], [], []>} : vector<16x128xf32>, vector<128x256xf32>, vector<16x256xf32> -> vector<16x256xf32>
    %83 = vector.broadcast %81 : vector<1x256xf32> to vector<16x256xf32>
    %84 = arith.addf %82, %83 : vector<16x256xf32>
    %85 = vector.extract_strided_slice %84 {offsets = [0, 0], sizes = [16, 128], strides = [1, 1]} : vector<16x256xf32> to vector<16x128xf32>
    %86 = vector.extract_strided_slice %84 {offsets = [0, 128], sizes = [16, 128], strides = [1, 1]} : vector<16x256xf32> to vector<16x128xf32>
    %87 = arith.negf %86 : vector<16x128xf32>
    %88 = math.exp %87 : vector<16x128xf32>
    %cst_48 = arith.constant 1.000000e+00 : f32
    %89 = vector.broadcast %cst_48 : f32 to vector<16x128xf32>
    %90 = arith.addf %89, %88 : vector<16x128xf32>
    %91 = arith.divf %89, %90 : vector<16x128xf32>
    %92 = arith.mulf %85, %91 : vector<16x128xf32>
    %c3_49 = arith.constant 3 : index
    %c0_50 = arith.constant 0 : index
    %c0_51 = arith.constant 0 : index
    %93 = vector.load %arg5[%c3_49, %c0_50, %c0_51] : memref<4x128x256xf32, #tpu.memory_space<vmem>>, vector<1x128x256xf32>
    %94 = vector.shape_cast %93 : vector<1x128x256xf32> to vector<128x256xf32>
    %c3_52 = arith.constant 3 : index
    %c0_53 = arith.constant 0 : index
    %c0_54 = arith.constant 0 : index
    %95 = vector.load %arg6[%c3_52, %c0_53, %c0_54] : memref<4x1x256xf32, #tpu.memory_space<vmem>>, vector<1x1x256xf32>
    %96 = vector.shape_cast %95 : vector<1x1x256xf32> to vector<1x256xf32>
    %cst_55 = arith.constant dense<0.000000e+00> : vector<16x256xf32>
    %97 = tpu.matmul %77, %94, %cst_55 {dimension_numbers = #tpu.dot_dimension_numbers<[1], [0], [0], [1], [0, 0, 1, 1], [], []>} : vector<16x128xf32>, vector<128x256xf32>, vector<16x256xf32> -> vector<16x256xf32>
    %98 = vector.broadcast %96 : vector<1x256xf32> to vector<16x256xf32>
    %99 = arith.addf %97, %98 : vector<16x256xf32>
    %100 = vector.extract_strided_slice %99 {offsets = [0, 0], sizes = [16, 128], strides = [1, 1]} : vector<16x256xf32> to vector<16x128xf32>
    %101 = vector.extract_strided_slice %99 {offsets = [0, 128], sizes = [16, 128], strides = [1, 1]} : vector<16x256xf32> to vector<16x128xf32>
    %102 = arith.negf %101 : vector<16x128xf32>
    %103 = math.exp %102 : vector<16x128xf32>
    %cst_56 = arith.constant 1.000000e+00 : f32
    %104 = vector.broadcast %cst_56 : f32 to vector<16x128xf32>
    %105 = arith.addf %104, %103 : vector<16x128xf32>
    %106 = arith.divf %104, %105 : vector<16x128xf32>
    %107 = arith.mulf %100, %106 : vector<16x128xf32>
    %c0_57 = arith.constant 0 : index
    %c0_58 = arith.constant 0 : index
    %108 = vector.load %arg7[%c0_57, %c0_58] : memref<128x32xf32, #tpu.memory_space<vmem>>, vector<128x32xf32>
    %cst_59 = arith.constant dense<0.000000e+00> : vector<16x32xf32>
    %109 = tpu.matmul %92, %108, %cst_59 {dimension_numbers = #tpu.dot_dimension_numbers<[1], [0], [0], [1], [0, 0, 1, 1], [], []>} : vector<16x128xf32>, vector<128x32xf32>, vector<16x32xf32> -> vector<16x32xf32>
    %c0_60 = arith.constant 0 : index
    %c0_61 = arith.constant 0 : index
    %110 = vector.load %arg8[%c0_60, %c0_61] : memref<128x32xf32, #tpu.memory_space<vmem>>, vector<128x32xf32>
    %cst_62 = arith.constant dense<0.000000e+00> : vector<16x32xf32>
    %111 = tpu.matmul %107, %110, %cst_62 {dimension_numbers = #tpu.dot_dimension_numbers<[1], [0], [0], [1], [0, 0, 1, 1], [], []>} : vector<16x128xf32>, vector<128x32xf32>, vector<16x32xf32> -> vector<16x32xf32>
    %112 = arith.addf %109, %111 : vector<16x32xf32>
    %c0_63 = arith.constant 0 : index
    %c0_64 = arith.constant 0 : index
    %113 = vector.load %arg9[%c0_63, %c0_64] : memref<32x32xf32, #tpu.memory_space<vmem>>, vector<32x32xf32>
    %cst_65 = arith.constant dense<0.000000e+00> : vector<16x32xf32>
    %114 = tpu.matmul %112, %113, %cst_65 {dimension_numbers = #tpu.dot_dimension_numbers<[1], [0], [0], [1], [0, 0, 1, 1], [], []>} : vector<16x32xf32>, vector<32x32xf32>, vector<16x32xf32> -> vector<16x32xf32>
    %c0_66 = arith.constant 0 : index
    %c0_67 = arith.constant 0 : index
    %115 = vector.load %arg10[%c0_66, %c0_67] : memref<1x32xf32, #tpu.memory_space<vmem>>, vector<1x32xf32>
    %116 = vector.broadcast %115 : vector<1x32xf32> to vector<16x32xf32>
    %117 = arith.addf %114, %116 : vector<16x32xf32>
    %118 = arith.negf %117 : vector<16x32xf32>
    %119 = math.exp %118 : vector<16x32xf32>
    %cst_68 = arith.constant 1.000000e+00 : f32
    %120 = vector.broadcast %cst_68 : f32 to vector<16x32xf32>
    %121 = arith.addf %120, %119 : vector<16x32xf32>
    %122 = arith.divf %120, %121 : vector<16x32xf32>
    %c0_69 = arith.constant 0 : index
    %c0_70 = arith.constant 0 : index
    %123 = vector.load %arg11[%c0_69, %c0_70] : memref<32x8xf32, #tpu.memory_space<vmem>>, vector<32x8xf32>
    %cst_71 = arith.constant dense<0.000000e+00> : vector<16x8xf32>
    %124 = tpu.matmul %122, %123, %cst_71 {dimension_numbers = #tpu.dot_dimension_numbers<[1], [0], [0], [1], [0, 0, 1, 1], [], []>} : vector<16x32xf32>, vector<32x8xf32>, vector<16x8xf32> -> vector<16x8xf32>
    %c0_72 = arith.constant 0 : index
    %c0_73 = arith.constant 0 : index
    %125 = vector.load %arg12[%c0_72, %c0_73] : memref<1x8xf32, #tpu.memory_space<vmem>>, vector<1x8xf32>
    %126 = vector.broadcast %125 : vector<1x8xf32> to vector<16x8xf32>
    %127 = arith.addf %124, %126 : vector<16x8xf32>
    %c0_74 = arith.constant 0 : index
    %c0_75 = arith.constant 0 : index
    %128 = vector.load %arg15[%c0_74, %c0_75] : memref<8x8xf32, #tpu.memory_space<vmem>>, vector<8x8xf32>
    %cst_76 = arith.constant dense<0.000000e+00> : vector<16x8xf32>
    %129 = tpu.matmul %1, %128, %cst_76 {dimension_numbers = #tpu.dot_dimension_numbers<[1], [0], [0], [1], [0, 0, 1, 1], [], []>} : vector<16x8xf32>, vector<8x8xf32>, vector<16x8xf32> -> vector<16x8xf32>
    %c0_77 = arith.constant 0 : index
    %c0_78 = arith.constant 0 : index
    %130 = vector.load %arg16[%c0_77, %c0_78] : memref<1x8xf32, #tpu.memory_space<vmem>>, vector<1x8xf32>
    %131 = vector.broadcast %130 : vector<1x8xf32> to vector<16x8xf32>
    %132 = arith.addf %129, %131 : vector<16x8xf32>
    %c0_79 = arith.constant 0 : index
    %c0_80 = arith.constant 0 : index
    %133 = vector.load %arg13[%c0_79, %c0_80] : memref<32x8xf32, #tpu.memory_space<vmem>>, vector<32x8xf32>
    %cst_81 = arith.constant dense<0.000000e+00> : vector<16x8xf32>
    %134 = tpu.matmul %112, %133, %cst_81 {dimension_numbers = #tpu.dot_dimension_numbers<[1], [0], [0], [1], [0, 0, 1, 1], [], []>} : vector<16x32xf32>, vector<32x8xf32>, vector<16x8xf32> -> vector<16x8xf32>
    %c0_82 = arith.constant 0 : index
    %c0_83 = arith.constant 0 : index
    %135 = vector.load %arg14[%c0_82, %c0_83] : memref<1x8xf32, #tpu.memory_space<vmem>>, vector<1x8xf32>
    %136 = vector.broadcast %135 : vector<1x8xf32> to vector<16x8xf32>
    %137 = arith.addf %134, %136 : vector<16x8xf32>
    %c0_84 = arith.constant 0 : index
    %c0_85 = arith.constant 0 : index
    %c0_86 = arith.constant 0 : index
    %138 = vector.load %arg17[%c0_84, %c0_85, %c0_86] : memref<1x16x8xf32, #tpu.memory_space<vmem>>, vector<1x16x8xf32>
    %139 = vector.shape_cast %138 : vector<1x16x8xf32> to vector<16x8xf32>
    %140 = vector.shape_cast %127 : vector<16x8xf32> to vector<1x16x8xf32>
    tpu.vector_store %arg17[%c0_84, %c0_85, %c0_86], %140 {strides = array<i32>} : memref<1x16x8xf32, #tpu.memory_space<vmem>>, vector<1x16x8xf32>,
    %141 = arith.subf %137, %132 : vector<16x8xf32>
    %142 = arith.negf %141 : vector<16x8xf32>
    %143 = math.exp %142 : vector<16x8xf32>
    %cst_87 = arith.constant 1.000000e+00 : f32
    %144 = vector.broadcast %cst_87 : f32 to vector<16x8xf32>
    %145 = arith.addf %144, %143 : vector<16x8xf32>
    %146 = arith.divf %144, %145 : vector<16x8xf32>
    %c0_88 = arith.constant 0 : index
    %c0_89 = arith.constant 0 : index
    %c0_90 = arith.constant 0 : index
    %147 = vector.load %arg18[%c0_88, %c0_89, %c0_90] : memref<1x16x8xf32, #tpu.memory_space<vmem>>, vector<1x16x8xf32>
    %148 = vector.shape_cast %147 : vector<1x16x8xf32> to vector<16x8xf32>
    %149 = vector.shape_cast %146 : vector<16x8xf32> to vector<1x16x8xf32>
    tpu.vector_store %arg18[%c0_88, %c0_89, %c0_90], %149 {strides = array<i32>} : memref<1x16x8xf32, #tpu.memory_space<vmem>>, vector<1x16x8xf32>,
    return
  }
  func.func @transform_0(%arg0: i32) -> (i32, i32, i32) {
    %c0_i32 = arith.constant 0 : i32
    %c0_i32_0 = arith.constant 0 : i32
    %c0_i32_1 = arith.constant 0 : i32
    return %arg0, %c0_i32, %c0_i32_0 : i32, i32, i32
  }
  func.func @transform_1(%arg0: i32) -> (i32, i32) {
    %c0_i32 = arith.constant 0 : i32
    %c0_i32_0 = arith.constant 0 : i32
    %c0_i32_1 = arith.constant 0 : i32
    return %c0_i32, %c0_i32_0 : i32, i32
  }
  func.func @transform_2(%arg0: i32) -> (i32, i32, i32) {
    %c0_i32 = arith.constant 0 : i32
    %c0_i32_0 = arith.constant 0 : i32
    %c0_i32_1 = arith.constant 0 : i32
    %c0_i32_2 = arith.constant 0 : i32
    return %c0_i32, %c0_i32_0, %c0_i32_1 : i32, i32, i32
  }
  func.func @transform_3(%arg0: i32) -> (i32, i32, i32) {
    %c0_i32 = arith.constant 0 : i32
    %c0_i32_0 = arith.constant 0 : i32
    %c0_i32_1 = arith.constant 0 : i32
    %c0_i32_2 = arith.constant 0 : i32
    return %c0_i32, %c0_i32_0, %c0_i32_1 : i32, i32, i32
  }
  func.func @transform_4(%arg0: i32) -> (i32, i32, i32) {
    %c0_i32 = arith.constant 0 : i32
    %c0_i32_0 = arith.constant 0 : i32
    %c0_i32_1 = arith.constant 0 : i32
    %c0_i32_2 = arith.constant 0 : i32
    return %c0_i32, %c0_i32_0, %c0_i32_1 : i32, i32, i32
  }
  func.func @transform_5(%arg0: i32) -> (i32, i32, i32) {
    %c0_i32 = arith.constant 0 : i32
    %c0_i32_0 = arith.constant 0 : i32
    %c0_i32_1 = arith.constant 0 : i32
    %c0_i32_2 = arith.constant 0 : i32
    return %c0_i32, %c0_i32_0, %c0_i32_1 : i32, i32, i32
  }
  func.func @transform_6(%arg0: i32) -> (i32, i32) {
    %c0_i32 = arith.constant 0 : i32
    %c0_i32_0 = arith.constant 0 : i32
    %c0_i32_1 = arith.constant 0 : i32
    return %c0_i32, %c0_i32_0 : i32, i32
  }
  func.func @transform_7(%arg0: i32) -> (i32, i32) {
    %c0_i32 = arith.constant 0 : i32
    %c0_i32_0 = arith.constant 0 : i32
    %c0_i32_1 = arith.constant 0 : i32
    return %c0_i32, %c0_i32_0 : i32, i32
  }
  func.func @transform_8(%arg0: i32) -> (i32, i32) {
    %c0_i32 = arith.constant 0 : i32
    %c0_i32_0 = arith.constant 0 : i32
    %c0_i32_1 = arith.constant 0 : i32
    return %c0_i32, %c0_i32_0 : i32, i32
  }
  func.func @transform_9(%arg0: i32) -> (i32, i32) {
    %c0_i32 = arith.constant 0 : i32
    %c0_i32_0 = arith.constant 0 : i32
    %c0_i32_1 = arith.constant 0 : i32
    return %c0_i32, %c0_i32_0 : i32, i32
  }
  func.func @transform_10(%arg0: i32) -> (i32, i32) {
    %c0_i32 = arith.constant 0 : i32
    %c0_i32_0 = arith.constant 0 : i32
    %c0_i32_1 = arith.constant 0 : i32
    return %c0_i32, %c0_i32_0 : i32, i32
  }
  func.func @transform_11(%arg0: i32) -> (i32, i32) {
    %c0_i32 = arith.constant 0 : i32
    %c0_i32_0 = arith.constant 0 : i32
    %c0_i32_1 = arith.constant 0 : i32
    return %c0_i32, %c0_i32_0 : i32, i32
  }
  func.func @transform_12(%arg0: i32) -> (i32, i32) {
    %c0_i32 = arith.constant 0 : i32
    %c0_i32_0 = arith.constant 0 : i32
    %c0_i32_1 = arith.constant 0 : i32
    return %c0_i32, %c0_i32_0 : i32, i32
  }
  func.func @transform_13(%arg0: i32) -> (i32, i32) {
    %c0_i32 = arith.constant 0 : i32
    %c0_i32_0 = arith.constant 0 : i32
    %c0_i32_1 = arith.constant 0 : i32
    return %c0_i32, %c0_i32_0 : i32, i32
  }
  func.func @transform_14(%arg0: i32) -> (i32, i32) {
    %c0_i32 = arith.constant 0 : i32
    %c0_i32_0 = arith.constant 0 : i32
    %c0_i32_1 = arith.constant 0 : i32
    return %c0_i32, %c0_i32_0 : i32, i32
  }
  func.func @transform_15(%arg0: i32) -> (i32, i32) {
    %c0_i32 = arith.constant 0 : i32
    %c0_i32_0 = arith.constant 0 : i32
    %c0_i32_1 = arith.constant 0 : i32
    return %c0_i32, %c0_i32_0 : i32, i32
  }
  func.func @transform_16(%arg0: i32) -> (i32, i32, i32) {
    %c0_i32 = arith.constant 0 : i32
    %c0_i32_0 = arith.constant 0 : i32
    %c0_i32_1 = arith.constant 0 : i32
    return %arg0, %c0_i32, %c0_i32_0 : i32, i32, i32
  }
  func.func @transform_17(%arg0: i32) -> (i32, i32, i32) {
    %c0_i32 = arith.constant 0 : i32
    %c0_i32_0 = arith.constant 0 : i32
    %c0_i32_1 = arith.constant 0 : i32
    return %arg0, %c0_i32, %c0_i32_0 : i32, i32, i32
  }
}

</mosaic_0001>

<llo_original>
// kernel: stock_block_forward.1
$region0: #{stock_block_forward.1}
  #allocation0 [shape = 'u32[]', space=smem, size = 0x4, offset = 0x4, fixed_abs, tag = 'smem constant byte address 0x4 - core index']
  #allocation1 [shape = 'u32[144,128]{1,0:T(1,128)}', space=vmem, size = 0x12000, scoped, tag = 'internal scratch']
  %s0 = inlined_call_operand.vmem [shape: f32[2,16,8], index: 0, kind: input, shape index: {}]
  %s1 = inlined_call_operand.vmem [shape: f32[64,16], index: 1, kind: input, shape index: {}]
  %s2 = inlined_call_operand.vmem [shape: f32[4,8,256], index: 2, kind: input, shape index: {}]
  %s3 = inlined_call_operand.vmem [shape: f32[2,1,256], index: 3, kind: input, shape index: {}]
  %s4 = inlined_call_operand.vmem [shape: f32[4,128,256], index: 4, kind: input, shape index: {}]
  %s5 = inlined_call_operand.vmem [shape: f32[4,1,256], index: 5, kind: input, shape index: {}]
  %s6 = inlined_call_operand.vmem [shape: f32[128,32], index: 6, kind: input, shape index: {}]
  %s7 = inlined_call_operand.vmem [shape: f32[128,32], index: 7, kind: input, shape index: {}]
  %s8 = inlined_call_operand.vmem [shape: f32[32,32], index: 8, kind: input, shape index: {}]
  %s9 = inlined_call_operand.vmem [shape: f32[1,32], index: 9, kind: input, shape index: {}]
  %s10 = inlined_call_operand.vmem [shape: f32[32,8], index: 10, kind: input, shape index: {}]
  %s11 = inlined_call_operand.vmem [shape: f32[1,8], index: 11, kind: input, shape index: {}]
  %s12 = inlined_call_operand.vmem [shape: f32[32,8], index: 12, kind: input, shape index: {}]
  %s13 = inlined_call_operand.vmem [shape: f32[1,8], index: 13, kind: input, shape index: {}]
  %s14 = inlined_call_operand.vmem [shape: f32[8,8], index: 14, kind: input, shape index: {}]
  %s15 = inlined_call_operand.vmem [shape: f32[1,8], index: 15, kind: input, shape index: {}]
  %s16 = inlined_call_operand.vmem [shape: f32[2,16,8], index: 16, kind: output, shape index: {0}]
  %s17 = inlined_call_operand.vmem [shape: f32[2,16,8], index: 17, kind: output, shape index: {1}]
  %18 = xla_tuple %s16, %s17
  %s19 = sld [smem:[#allocation0]]
  $region105: #{stock_block_forward.1} parent=0
    _
  %s21 = ssub.s32 1, %s19
  %s22 = scalar_select 0, %s21, %s19
  loop: start=0, step=1, limit=4
  $region2: #{stock_block_forward.1} parent=0 // loop_pre_header
    _
  $region3: #{stock_block_forward.1} parent=0 // loop_header
    %s24 = sphi 0, %s28
    %p25 = scmp.ge.s32.totalorder %s24, 4
    %s34 = sphi 0, %s36
    %s37 = sphi 0, %s34
    %s38 = sphi 0, %s37
    %s54 = sphi 0, %s38
    %s58 = sphi 0, %s58
    %s60 = sphi 0, %s58
    %s61 = sphi 0, %s60
    %s75 = sphi 0, %s61
    %s79 = sphi 0, %s79
    %s81 = sphi 0, %s79
    %s82 = sphi 0, %s81
    %s96 = sphi 0, %s82
    %s100 = sphi 0, %s100
    %s102 = sphi 0, %s100
    %s103 = sphi 0, %s102
    %s117 = sphi 0, %s103
    %s121 = sphi 0, %s121
    %s123 = sphi 0, %s121
    %s124 = sphi 0, %s123
    %s138 = sphi 0, %s124
    %s142 = sphi 0, %s142
    %s144 = sphi 0, %s142
    %s145 = sphi 0, %s144
    %s159 = sphi 0, %s145
    %s163 = sphi 0, %s163
    %s165 = sphi 0, %s163
    %s166 = sphi 0, %s165
    %s180 = sphi 0, %s166
    %s184 = sphi 0, %s184
    %s186 = sphi 0, %s184
    %s187 = sphi 0, %s186
    %s201 = sphi 0, %s187
    %s205 = sphi 0, %s205
    %s207 = sphi 0, %s205
    %s208 = sphi 0, %s207
    %s222 = sphi 0, %s208
    %s226 = sphi 0, %s226
    %s228 = sphi 0, %s226
    %s229 = sphi 0, %s228
    %s243 = sphi 0, %s229
    %s247 = sphi 0, %s247
    %s249 = sphi 0, %s247
    %s250 = sphi 0, %s249
    %s264 = sphi 0, %s250
    %s268 = sphi 0, %s268
    %s270 = sphi 0, %s268
    %s271 = sphi 0, %s270
    %s285 = sphi 0, %s271
    %s289 = sphi 0, %s289
    %s291 = sphi 0, %s289
    %s292 = sphi 0, %s291
    %s306 = sphi 0, %s292
    %s310 = sphi 0, %s310
    %s312 = sphi 0, %s310
    %s313 = sphi 0, %s312
    %s327 = sphi 0, %s313
    %s331 = sphi 0, %s331
    %s333 = sphi 0, %s331
    %s334 = sphi 0, %s333
    %s348 = sphi 0, %s334
    %s352 = sphi 0, %s352
    %s354 = sphi 0, %s352
    %s355 = sphi 0, %s354
    %s369 = sphi 0, %s355
    %s375 = sphi 0, %s377
    %s378 = sphi 0, %s375
    %s379 = sphi 0, %s378
    %s395 = sphi 0, %s379
    %s401 = sphi 0, %s403
    %s404 = sphi 0, %s401
    %s405 = sphi 0, %s404
    %s421 = sphi 0, %s405
  $region4: #{stock_block_forward.1} parent=0 // loop_header_branch
    %27 = sbr.rel (%p25) target = $region8
  $region5: #{stock_block_forward.1} parent=0 // loop_body
    %s29 = ssub.s32 %s24, 1
    %s30 = ssub.s32 %s24, 2
    %s31 = sadd.s32 %s24, 1
    %s32 = ssub.s32 %s24, %s31
    %p33 = scmp.eq.s32.totalorder %s32, 0
    %s35 = sadd.s32 %s34, 1
    %s36 = scalar_select %p33, %s34, %s35
    %p39 = pneg %p33
    %p40 = scmp.eq.s32.totalorder %s24, 1
    %p41 = por %p39, %p40
    %p42 = scmp.ne.s32.totalorder %s34, %s37
    %p43 = scmp.eq.s32.totalorder %s24, 0
    %p44 = por %p42, %p43
    %p45 = scmp.ne.s32.totalorder %s34, %s37
    %p46 = scmp.eq.s32.totalorder %s29, 1
    %p47 = por %p45, %p46
    %p48 = scmp.ne.s32.totalorder %s37, %s38
    %p49 = scmp.eq.s32.totalorder %s29, 0
    %p50 = por %p48, %p49
    %p51 = scmp.ne.s32.totalorder %s37, %s38
    %p52 = scmp.eq.s32.totalorder %s30, 1
    %p53 = por %p51, %p52
    %p55 = scmp.ne.s32.totalorder %s38, %s54
    %p56 = scmp.eq.s32.totalorder %s30, 0
    %p57 = por %p55, %p56
    %s59 = sadd.s32 %s58, 1
    %p62 = scmp.eq.s32.totalorder %s24, 1
    %p63 = scmp.ne.s32.totalorder %s58, %s60
    %p64 = scmp.eq.s32.totalorder %s24, 0
    %p65 = por %p63, %p64
    %p66 = scmp.ne.s32.totalorder %s58, %s60
    %p67 = scmp.eq.s32.totalorder %s29, 1
    %p68 = por %p66, %p67
    %p69 = scmp.ne.s32.totalorder %s60, %s61
    %p70 = scmp.eq.s32.totalorder %s29, 0
    %p71 = por %p69, %p70
    %p72 = scmp.ne.s32.totalorder %s60, %s61
    %p73 = scmp.eq.s32.totalorder %s30, 1
    %p74 = por %p72, %p73
    %p76 = scmp.ne.s32.totalorder %s61, %s75
    %p77 = scmp.eq.s32.totalorder %s30, 0
    %p78 = por %p76, %p77
    %s80 = sadd.s32 %s79, 1
    %p83 = scmp.eq.s32.totalorder %s24, 1
    %p84 = scmp.ne.s32.totalorder %s79, %s81
    %p85 = scmp.eq.s32.totalorder %s24, 0
    %p86 = por %p84, %p85
    %p87 = scmp.ne.s32.totalorder %s79, %s81
    %p88 = scmp.eq.s32.totalorder %s29, 1
    %p89 = por %p87, %p88
    %p90 = scmp.ne.s32.totalorder %s81, %s82
    %p91 = scmp.eq.s32.totalorder %s29, 0
    %p92 = por %p90, %p91
    %p93 = scmp.ne.s32.totalorder %s81, %s82
    %p94 = scmp.eq.s32.totalorder %s30, 1
    %p95 = por %p93, %p94
    %p97 = scmp.ne.s32.totalorder %s82, %s96
    %p98 = scmp.eq.s32.totalorder %s30, 0
    %p99 = por %p97, %p98
    %s101 = sadd.s32 %s100, 1
    %p104 = scmp.eq.s32.totalorder %s24, 1
    %p105 = scmp.ne.s32.totalorder %s100, %s102
    %p106 = scmp.eq.s32.totalorder %s24, 0
    %p107 = por %p105, %p106
    %p108 = scmp.ne.s32.totalorder %s100, %s102
    %p109 = scmp.eq.s32.totalorder %s29, 1
    %p110 = por %p108, %p109
    %p111 = scmp.ne.s32.totalorder %s102, %s103
    %p112 = scmp.eq.s32.totalorder %s29, 0
    %p113 = por %p111, %p112
    %p114 = scmp.ne.s32.totalorder %s102, %s103
    %p115 = scmp.eq.s32.totalorder %s30, 1
    %p116 = por %p114, %p115
    %p118 = scmp.ne.s32.totalorder %s103, %s117
    %p119 = scmp.eq.s32.totalorder %s30, 0
    %p120 = por %p118, %p119
    %s122 = sadd.s32 %s121, 1
    %p125 = scmp.eq.s32.totalorder %s24, 1
    %p126 = scmp.ne.s32.totalorder %s121, %s123
    %p127 = scmp.eq.s32.totalorder %s24, 0
    %p128 = por %p126, %p127
    %p129 = scmp.ne.s32.totalorder %s121, %s123
    %p130 = scmp.eq.s32.totalorder %s29, 1
    %p131 = por %p129, %p130
    %p132 = scmp.ne.s32.totalorder %s123, %s124
    %p133 = scmp.eq.s32.totalorder %s29, 0
    %p134 = por %p132, %p133
    %p135 = scmp.ne.s32.totalorder %s123, %s124
    %p136 = scmp.eq.s32.totalorder %s30, 1
    %p137 = por %p135, %p136
    %p139 = scmp.ne.s32.totalorder %s124, %s138
    %p140 = scmp.eq.s32.totalorder %s30, 0
    %p141 = por %p139, %p140
    %s143 = sadd.s32 %s142, 1
    %p146 = scmp.eq.s32.totalorder %s24, 1
    %p147 = scmp.ne.s32.totalorder %s142, %s144
    %p148 = scmp.eq.s32.totalorder %s24, 0
    %p149 = por %p147, %p148
    %p150 = scmp.ne.s32.totalorder %s142, %s144
    %p151 = scmp.eq.s32.totalorder %s29, 1
    %p152 = por %p150, %p151
    %p153 = scmp.ne.s32.totalorder %s144, %s145
    %p154 = scmp.eq.s32.totalorder %s29, 0
    %p155 = por %p153, %p154
    %p156 = scmp.ne.s32.totalorder %s144, %s145
    %p157 = scmp.eq.s32.totalorder %s30, 1
    %p158 = por %p156, %p157
    %p160 = scmp.ne.s32.totalorder %s145, %s159
    %p161 = scmp.eq.s32.totalorder %s30, 0
    %p162 = por %p160, %p161
    %s164 = sadd.s32 %s163, 1
    %p167 = scmp.eq.s32.totalorder %s24, 1
    %p168 = scmp.ne.s32.totalorder %s163, %s165
    %p169 = scmp.eq.s32.totalorder %s24, 0
    %p170 = por %p168, %p169
    %p171 = scmp.ne.s32.totalorder %s163, %s165
    %p172 = scmp.eq.s32.totalorder %s29, 1
    %p173 = por %p171, %p172
    %p174 = scmp.ne.s32.totalorder %s165, %s166
    %p175 = scmp.eq.s32.totalorder %s29, 0
    %p176 = por %p174, %p175
    %p177 = scmp.ne.s32.totalorder %s165, %s166
    %p178 = scmp.eq.s32.totalorder %s30, 1
    %p179 = por %p177, %p178
    %p181 = scmp.ne.s32.totalorder %s166, %s180
    %p182 = scmp.eq.s32.totalorder %s30, 0
    %p183 = por %p181, %p182
    %s185 = sadd.s32 %s184, 1
    %p188 = scmp.eq.s32.totalorder %s24, 1
    %p189 = scmp.ne.s32.totalorder %s184, %s186
    %p190 = scmp.eq.s32.totalorder %s24, 0
    %p191 = por %p189, %p190
    %p192 = scmp.ne.s32.totalorder %s184, %s186
    %p193 = scmp.eq.s32.totalorder %s29, 1
    %p194 = por %p192, %p193
    %p195 = scmp.ne.s32.totalorder %s186, %s187
    %p196 = scmp.eq.s32.totalorder %s29, 0
    %p197 = por %p195, %p196
    %p198 = scmp.ne.s32.totalorder %s186, %s187
    %p199 = scmp.eq.s32.totalorder %s30, 1
    %p200 = por %p198, %p199
    %p202 = scmp.ne.s32.totalorder %s187, %s201
    %p203 = scmp.eq.s32.totalorder %s30, 0
    %p204 = por %p202, %p203
    %s206 = sadd.s32 %s205, 1
    %p209 = scmp.eq.s32.totalorder %s24, 1
    %p210 = scmp.ne.s32.totalorder %s205, %s207
    %p211 = scmp.eq.s32.totalorder %s24, 0
    %p212 = por %p210, %p211
    %p213 = scmp.ne.s32.totalorder %s205, %s207
    %p214 = scmp.eq.s32.totalorder %s29, 1
    %p215 = por %p213, %p214
    %p216 = scmp.ne.s32.totalorder %s207, %s208
    %p217 = scmp.eq.s32.totalorder %s29, 0
    %p218 = por %p216, %p217
    %p219 = scmp.ne.s32.totalorder %s207, %s208
    %p220 = scmp.eq.s32.totalorder %s30, 1
    %p221 = por %p219, %p220
    %p223 = scmp.ne.s32.totalorder %s208, %s222
    %p224 = scmp.eq.s32.totalorder %s30, 0
    %p225 = por %p223, %p224
    %s227 = sadd.s32 %s226, 1
    %p230 = scmp.eq.s32.totalorder %s24, 1
    %p231 = scmp.ne.s32.totalorder %s226, %s228
    %p232 = scmp.eq.s32.totalorder %s24, 0
    %p233 = por %p231, %p232
    %p234 = scmp.ne.s32.totalorder %s226, %s228
    %p235 = scmp.eq.s32.totalorder %s29, 1
    %p236 = por %p234, %p235
    %p237 = scmp.ne.s32.totalorder %s228, %s229
    %p238 = scmp.eq.s32.totalorder %s29, 0
    %p239 = por %p237, %p238
    %p240 = scmp.ne.s32.totalorder %s228, %s229
    %p241 = scmp.eq.s32.totalorder %s30, 1
    %p242 = por %p240, %p241
    %p244 = scmp.ne.s32.totalorder %s229, %s243
    %p245 = scmp.eq.s32.totalorder %s30, 0
    %p246 = por %p244, %p245
    %s248 = sadd.s32 %s247, 1
    %p251 = scmp.eq.s32.totalorder %s24, 1
    %p252 = scmp.ne.s32.totalorder %s247, %s249
    %p253 = scmp.eq.s32.totalorder %s24, 0
    %p254 = por %p252, %p253
    %p255 = scmp.ne.s32.totalorder %s247, %s249
    %p256 = scmp.eq.s32.totalorder %s29, 1
    %p257 = por %p255, %p256
    %p258 = scmp.ne.s32.totalorder %s249, %s250
    %p259 = scmp.eq.s32.totalorder %s29, 0
    %p260 = por %p258, %p259
    %p261 = scmp.ne.s32.totalorder %s249, %s250
    %p262 = scmp.eq.s32.totalorder %s30, 1
    %p263 = por %p261, %p262
    %p265 = scmp.ne.s32.totalorder %s250, %s264
    %p266 = scmp.eq.s32.totalorder %s30, 0
    %p267 = por %p265, %p266
    %s269 = sadd.s32 %s268, 1
    %p272 = scmp.eq.s32.totalorder %s24, 1
    %p273 = scmp.ne.s32.totalorder %s268, %s270
    %p274 = scmp.eq.s32.totalorder %s24, 0
    %p275 = por %p273, %p274
    %p276 = scmp.ne.s32.totalorder %s268, %s270
    %p277 = scmp.eq.s32.totalorder %s29, 1
    %p278 = por %p276, %p277
    %p279 = scmp.ne.s32.totalorder %s270, %s271
    %p280 = scmp.eq.s32.totalorder %s29, 0
    %p281 = por %p279, %p280
    %p282 = scmp.ne.s32.totalorder %s270, %s271
    %p283 = scmp.eq.s32.totalorder %s30, 1
    %p284 = por %p282, %p283
    %p286 = scmp.ne.s32.totalorder %s271, %s285
    %p287 = scmp.eq.s32.totalorder %s30, 0
    %p288 = por %p286, %p287
    %s290 = sadd.s32 %s289, 1
    %p293 = scmp.eq.s32.totalorder %s24, 1
    %p294 = scmp.ne.s32.totalorder %s289, %s291
    %p295 = scmp.eq.s32.totalorder %s24, 0
    %p296 = por %p294, %p295
    %p297 = scmp.ne.s32.totalorder %s289, %s291
    %p298 = scmp.eq.s32.totalorder %s29, 1
    %p299 = por %p297, %p298
    %p300 = scmp.ne.s32.totalorder %s291, %s292
    %p301 = scmp.eq.s32.totalorder %s29, 0
    %p302 = por %p300, %p301
    %p303 = scmp.ne.s32.totalorder %s291, %s292
    %p304 = scmp.eq.s32.totalorder %s30, 1
    %p305 = por %p303, %p304
    %p307 = scmp.ne.s32.totalorder %s292, %s306
    %p308 = scmp.eq.s32.totalorder %s30, 0
    %p309 = por %p307, %p308
    %s311 = sadd.s32 %s310, 1
    %p314 = scmp.eq.s32.totalorder %s24, 1
    %p315 = scmp.ne.s32.totalorder %s310, %s312
    %p316 = scmp.eq.s32.totalorder %s24, 0
    %p317 = por %p315, %p316
    %p318 = scmp.ne.s32.totalorder %s310, %s312
    %p319 = scmp.eq.s32.totalorder %s29, 1
    %p320 = por %p318, %p319
    %p321 = scmp.ne.s32.totalorder %s312, %s313
    %p322 = scmp.eq.s32.totalorder %s29, 0
    %p323 = por %p321, %p322
    %p324 = scmp.ne.s32.totalorder %s312, %s313
    %p325 = scmp.eq.s32.totalorder %s30, 1
    %p326 = por %p324, %p325
    %p328 = scmp.ne.s32.totalorder %s313, %s327
    %p329 = scmp.eq.s32.totalorder %s30, 0
    %p330 = por %p328, %p329
    %s332 = sadd.s32 %s331, 1
    %p335 = scmp.eq.s32.totalorder %s24, 1
    %p336 = scmp.ne.s32.totalorder %s331, %s333
    %p337 = scmp.eq.s32.totalorder %s24, 0
    %p338 = por %p336, %p337
    %p339 = scmp.ne.s32.totalorder %s331, %s333
    %p340 = scmp.eq.s32.totalorder %s29, 1
    %p341 = por %p339, %p340
    %p342 = scmp.ne.s32.totalorder %s333, %s334
    %p343 = scmp.eq.s32.totalorder %s29, 0
    %p344 = por %p342, %p343
    %p345 = scmp.ne.s32.totalorder %s333, %s334
    %p346 = scmp.eq.s32.totalorder %s30, 1
    %p347 = por %p345, %p346
    %p349 = scmp.ne.s32.totalorder %s334, %s348
    %p350 = scmp.eq.s32.totalorder %s30, 0
    %p351 = por %p349, %p350
    %s353 = sadd.s32 %s352, 1
    %p356 = scmp.eq.s32.totalorder %s24, 1
    %p357 = scmp.ne.s32.totalorder %s352, %s354
    %p358 = scmp.eq.s32.totalorder %s24, 0
    %p359 = por %p357, %p358
    %p360 = scmp.ne.s32.totalorder %s352, %s354
    %p361 = scmp.eq.s32.totalorder %s29, 1
    %p362 = por %p360, %p361
    %p363 = scmp.ne.s32.totalorder %s354, %s355
    %p364 = scmp.eq.s32.totalorder %s29, 0
    %p365 = por %p363, %p364
    %p366 = scmp.ne.s32.totalorder %s354, %s355
    %p367 = scmp.eq.s32.totalorder %s30, 1
    %p368 = por %p366, %p367
    %p370 = scmp.ne.s32.totalorder %s355, %s369
    %p371 = scmp.eq.s32.totalorder %s30, 0
    %p372 = por %p370, %p371
    %s373 = ssub.s32 %s24, %s31
    %p374 = scmp.eq.s32.totalorder %s373, 0
    %s376 = sadd.s32 %s375, 1
    %s377 = scalar_select %p374, %s375, %s376
    %p380 = pneg %p374
    %p381 = scmp.eq.s32.totalorder %s24, 1
    %p382 = por %p380, %p381
    %p383 = scmp.ne.s32.totalorder %s375, %s378
    %p384 = scmp.eq.s32.totalorder %s24, 0
    %p385 = por %p383, %p384
    %p386 = scmp.ne.s32.totalorder %s375, %s378
    %p387 = scmp.eq.s32.totalorder %s29, 1
    %p388 = por %p386, %p387
    %p389 = scmp.ne.s32.totalorder %s378, %s379
    %p390 = scmp.eq.s32.totalorder %s29, 0
    %p391 = por %p389, %p390
    %p392 = scmp.ne.s32.totalorder %s378, %s379
    %p393 = scmp.eq.s32.totalorder %s30, 1
    %p394 = por %p392, %p393
    %p396 = scmp.ne.s32.totalorder %s379, %s395
    %p397 = scmp.eq.s32.totalorder %s30, 0
    %p398 = por %p396, %p397
    %s399 = ssub.s32 %s24, %s31
    %p400 = scmp.eq.s32.totalorder %s399, 0
    %s402 = sadd.s32 %s401, 1
    %s403 = scalar_select %p400, %s401, %s402
    %p406 = pneg %p400
    %p407 = scmp.eq.s32.totalorder %s24, 1
    %p408 = por %p406, %p407
    %p409 = scmp.ne.s32.totalorder %s401, %s404
    %p410 = scmp.eq.s32.totalorder %s24, 0
    %p411 = por %p409, %p410
    %p412 = scmp.ne.s32.totalorder %s401, %s404
    %p413 = scmp.eq.s32.totalorder %s29, 1
    %p414 = por %p412, %p413
    %p415 = scmp.ne.s32.totalorder %s404, %s405
    %p416 = scmp.eq.s32.totalorder %s29, 0
    %p417 = por %p415, %p416
    %p418 = scmp.ne.s32.totalorder %s404, %s405
    %p419 = scmp.eq.s32.totalorder %s30, 1
    %p420 = por %p418, %p419
    %p422 = scmp.ne.s32.totalorder %s405, %s421
    %p423 = scmp.eq.s32.totalorder %s30, 0
    %p424 = por %p422, %p423
    %p425 = scmp.le.s32.totalorder 1, %s24
    %p426 = scmp.lt.s32.totalorder %s24, 3
    %p427 = pnand %p425, %p426
    %p428 = pneg %p427
    // Predicated region
    $region9: #{stock_block_forward.1} parent=5 // pred_check
      _
    $region10: #{stock_block_forward.1} parent=5 // pred_check_branch
      %430 = sbr.rel (%p427) target = $region12
    $region11: #{stock_block_forward.1} parent=5 // pred_region
      %s431 = ssub.s32 %s24, 1
      // Predicated region
      $region13: #{stock_block_forward.1} parent=11 // pred_check
        %p432 = pneg %p71
      $region14: #{stock_block_forward.1} parent=11 // pred_check_branch
        %434 = sbr.rel (%p432) target = $region16
      $region15: #{stock_block_forward.1} parent=11 // pred_region
        _
      $region16: #{stock_block_forward.1} parent=11 // pred_fallthru
        _
      // Predicated region
      $region17: #{stock_block_forward.1} parent=11 // pred_check
        %p435 = pneg %p92
      $region18: #{stock_block_forward.1} parent=11 // pred_check_branch
        %437 = sbr.rel (%p435) target = $region20
      $region19: #{stock_block_forward.1} parent=11 // pred_region
        _
      $region20: #{stock_block_forward.1} parent=11 // pred_fallthru
        _
      // Predicated region
      $region21: #{stock_block_forward.1} parent=11 // pred_check
        %p438 = pneg %p113
      $region22: #{stock_block_forward.1} parent=11 // pred_check_branch
        %440 = sbr.rel (%p438) target = $region24
      $region23: #{stock_block_forward.1} parent=11 // pred_region
        _
      $region24: #{stock_block_forward.1} parent=11 // pred_fallthru
        _
      // Predicated region
      $region25: #{stock_block_forward.1} parent=11 // pred_check
        %p441 = pneg %p134
      $region26: #{stock_block_forward.1} parent=11 // pred_check_branch
        %443 = sbr.rel (%p441) target = $region28
      $region27: #{stock_block_forward.1} parent=11 // pred_region
        _
      $region28: #{stock_block_forward.1} parent=11 // pred_fallthru
        _
      // Predicated region
      $region29: #{stock_block_forward.1} parent=11 // pred_check
        %p444 = pneg %p155
      $region30: #{stock_block_forward.1} parent=11 // pred_check_branch
        %446 = sbr.rel (%p444) target = $region32
      $region31: #{stock_block_forward.1} parent=11 // pred_region
        _
      $region32: #{stock_block_forward.1} parent=11 // pred_fallthru
        _
      // Predicated region
      $region33: #{stock_block_forward.1} parent=11 // pred_check
        %p447 = pneg %p176
      $region34: #{stock_block_forward.1} parent=11 // pred_check_branch
        %449 = sbr.rel (%p447) target = $region36
      $region35: #{stock_block_forward.1} parent=11 // pred_region
        _
      $region36: #{stock_block_forward.1} parent=11 // pred_fallthru
        _
      // Predicated region
      $region37: #{stock_block_forward.1} parent=11 // pred_check
        %p450 = pneg %p197
      $region38: #{stock_block_forward.1} parent=11 // pred_check_branch
        %452 = sbr.rel (%p450) target = $region40
      $region39: #{stock_block_forward.1} parent=11 // pred_region
        _
      $region40: #{stock_block_forward.1} parent=11 // pred_fallthru
        _
      // Predicated region
      $region41: #{stock_block_forward.1} parent=11 // pred_check
        %p453 = pneg %p218
      $region42: #{stock_block_forward.1} parent=11 // pred_check_branch
        %455 = sbr.rel (%p453) target = $region44
      $region43: #{stock_block_forward.1} parent=11 // pred_region
        _
      $region44: #{stock_block_forward.1} parent=11 // pred_fallthru
        _
      // Predicated region
      $region45: #{stock_block_forward.1} parent=11 // pred_check
        %p456 = pneg %p239
      $region46: #{stock_block_forward.1} parent=11 // pred_check_branch
        %458 = sbr.rel (%p456) target = $region48
      $region47: #{stock_block_forward.1} parent=11 // pred_region
        _
      $region48: #{stock_block_forward.1} parent=11 // pred_fallthru
        _
      // Predicated region
      $region49: #{stock_block_forward.1} parent=11 // pred_check
        %p459 = pneg %p260
      $region50: #{stock_block_forward.1} parent=11 // pred_check_branch
        %461 = sbr.rel (%p459) target = $region52
      $region51: #{stock_block_forward.1} parent=11 // pred_region
        _
      $region52: #{stock_block_forward.1} parent=11 // pred_fallthru
        _
      // Predicated region
      $region53: #{stock_block_forward.1} parent=11 // pred_check
        %p462 = pneg %p281
      $region54: #{stock_block_forward.1} parent=11 // pred_check_branch
        %464 = sbr.rel (%p462) target = $region56
      $region55: #{stock_block_forward.1} parent=11 // pred_region
        _
      $region56: #{stock_block_forward.1} parent=11 // pred_fallthru
        _
      // Predicated region
      $region57: #{stock_block_forward.1} parent=11 // pred_check
        %p465 = pneg %p302
      $region58: #{stock_block_forward.1} parent=11 // pred_check_branch
        %467 = sbr.rel (%p465) target = $region60
      $region59: #{stock_block_forward.1} parent=11 // pred_region
        _
      $region60: #{stock_block_forward.1} parent=11 // pred_fallthru
        _
      // Predicated region
      $region61: #{stock_block_forward.1} parent=11 // pred_check
        %p468 = pneg %p323
      $region62: #{stock_block_forward.1} parent=11 // pred_check_branch
        %470 = sbr.rel (%p468) target = $region64
      $region63: #{stock_block_forward.1} parent=11 // pred_region
        _
      $region64: #{stock_block_forward.1} parent=11 // pred_fallthru
        _
      // Predicated region
      $region65: #{stock_block_forward.1} parent=11 // pred_check
        %p471 = pneg %p344
      $region66: #{stock_block_forward.1} parent=11 // pred_check_branch
        %473 = sbr.rel (%p471) target = $region68
      $region67: #{stock_block_forward.1} parent=11 // pred_region
        _
      $region68: #{stock_block_forward.1} parent=11 // pred_fallthru
        _
      // Predicated region
      $region69: #{stock_block_forward.1} parent=11 // pred_check
        %p474 = pneg %p365
      $region70: #{stock_block_forward.1} parent=11 // pred_check_branch
        %476 = sbr.rel (%p474) target = $region72
      $region71: #{stock_block_forward.1} parent=11 // pred_region
        _
      $region72: #{stock_block_forward.1} parent=11 // pred_fallthru
        _
    $region12: #{stock_block_forward.1} parent=5 // pred_fallthru
      _
    %p477 = scmp.lt.s32.totalorder %s24, 2
    // Predicated region
    $region73: #{stock_block_forward.1} parent=5 // pred_check
      %p478 = pneg %p477
    $region74: #{stock_block_forward.1} parent=5 // pred_check_branch
      %480 = sbr.rel (%p478) target = $region76
    $region75: #{stock_block_forward.1} parent=5 // pred_region
      // Predicated region
      $region77: #{stock_block_forward.1} parent=75 // pred_check
        %p481 = pneg %p44
      $region78: #{stock_block_forward.1} parent=75 // pred_check_branch
        %483 = sbr.rel (%p481) target = $region80
      $region79: #{stock_block_forward.1} parent=75 // pred_region
        %p484 = scmp.lt.s32.totalorder %s24, 1
        %s485 = scalar_select %p484, %s24, 1
        %s486 = smul.addr %s485, 2
        %s487 = smul.addr %s486, 8
        %s488 = scalar_lea.vmem %s0, %s487
      $region80: #{stock_block_forward.1} parent=75 // pred_fallthru
        _
    $region76: #{stock_block_forward.1} parent=5 // pred_fallthru
      _
    %p489 = scmp.le.s32.totalorder 1, %s24
    %p490 = scmp.lt.s32.totalorder %s24, 3
    %p491 = pnand %p489, %p490
    %p492 = pneg %p491
    // Predicated region
    $region81: #{stock_block_forward.1} parent=5 // pred_check
      _
    $region82: #{stock_block_forward.1} parent=5 // pred_check_branch
      %494 = sbr.rel (%p491) target = $region84
    $region83: #{stock_block_forward.1} parent=5 // pred_region
      %s495 = ssub.s32 %s24, 1
      %p496 = scmp.lt.s32.totalorder %s29, 1
      %s497 = scalar_select %p496, %s29, 1
      %s498 = smul.addr %s497, 2
      %s499 = smul.addr %s498, 8
      %s500 = scalar_lea.vmem %s0, %s499
      %p501 = pneg %p50
      %p502 = pneg %p47
      %p503 = pneg %p71
      %p504 = pneg %p68
      %p505 = pneg %p92
      %p506 = pneg %p89
      %p507 = pneg %p113
      %p508 = pneg %p110
      %p509 = pneg %p134
      %p510 = pneg %p131
      %p511 = pneg %p155
      %p512 = pneg %p152
      %p513 = pneg %p176
      %p514 = pneg %p173
      %p515 = pneg %p197
      %p516 = pneg %p194
      %p517 = pneg %p218
      %p518 = pneg %p215
      %p519 = pneg %p239
      %p520 = pneg %p236
      %p521 = pneg %p260
      %p522 = pneg %p257
      %p523 = pneg %p281
      %p524 = pneg %p278
      %p525 = pneg %p302
      %p526 = pneg %p299
      %p527 = pneg %p323
      %p528 = pneg %p320
      %p529 = pneg %p344
      %p530 = pneg %p341
      %p531 = pneg %p365
      %p532 = pneg %p362
      %p533 = pneg %p391
      %p534 = pneg %p388
      %p535 = scmp.lt.s32.totalorder %s29, 1
      %s536 = scalar_select %p535, %s29, 1
      %s537 = smul.addr %s536, 2
      %s538 = smul.addr %s537, 8
      %s539 = scalar_lea.vmem %s16, %s538
      %p540 = pneg %p417
      %p541 = pneg %p414
      %p542 = scmp.lt.s32.totalorder %s29, 1
      %s543 = scalar_select %p542, %s29, 1
      %s544 = smul.addr %s543, 2
      %s545 = smul.addr %s544, 8
      %s546 = scalar_lea.vmem %s17, %s545
      %p547 = scmp.lt.s32.totalorder %s29, 1
      %s548 = scalar_select %p547, %s29, 1
      %s549 = smul.addr %s548, 2
      %s550 = smul.addr %s549, 8
      %s551 = scalar_lea.vmem %s0, %s550
      %p552 = scmp.lt.s32.totalorder %s29, 1
      %s553 = scalar_select %p552, %s29, 1
      %s554 = smul.addr %s553, 2
      %s555 = smul.addr %s554, 8
      %s556 = scalar_lea.vmem %s16, %s555
      %p557 = scmp.lt.s32.totalorder %s29, 1
      %s558 = scalar_select %p557, %s29, 1
      %s559 = smul.addr %s558, 2
      %s560 = smul.addr %s559, 8
      %s561 = scalar_lea.vmem %s17, %s560
      %v562 = vld [vmem:[%s551] sm:$0xff]
      %v563 = vld [vmem:[%s551 + $0x8] sm:$0xff]
      %v564 = vld [vmem:[%s1] sm:$0xff]
      %v565 = vld [vmem:[%s1 + $0x8] sm:$0xff]
      %v566 = vld [vmem:[%s1 + $0x10] sm:$0xff]
      %v567 = vld [vmem:[%s1 + $0x18] sm:$0xff]
      %v568 = vld [vmem:[%s1 + $0x20] sm:$0xff]
      %v569 = vld [vmem:[%s1 + $0x28] sm:$0xff]
      %v570 = vld [vmem:[%s1 + $0x30] sm:$0xff]
      %v571 = vld [vmem:[%s1 + $0x38] sm:$0xff]
      %vm572 = vcmask 130048
      %v574 = vsel %vm572, %v564, 0
      %v577 = vsel %vm572, %v565, 0
      %v580 = vsel %vm572, %v566, 0
      %v583 = vsel %vm572, %v567, 0
      %v586 = vsel %vm572, %v568, 0
      %v589 = vsel %vm572, %v569, 0
      %v592 = vsel %vm572, %v570, 0
      %v595 = vsel %vm572, %v571, 0
      %597 = vmatprep.subr.mxu0 0.0
      %598 = vmatpush1.msra.mxu0 0.0
      %599 = vmatprep.subr.mxu0 0.0
      %600 = vmatpush1.msra.mxu0 0.0
      %601 = vmatprep.subr.mxu0 0.0
      %602 = vmatpush1.msra.mxu0 0.0
      %603 = vmatprep.subr.mxu0 0.0
      %604 = vmatpush1.msra.mxu0 0.0
      %605 = vmatprep.subr.mxu0 0.0
      %606 = vmatpush1.msra.mxu0 0.0
      %607 = vmatprep.subr.mxu0 0.0
      %608 = vmatpush1.msra.mxu0 0.0
      %609 = vmatprep.subr.mxu0 0.0
      %610 = vmatpush1.msra.mxu0 0.0
      %611 = vmatprep.subr.mxu0 0.0
      %612 = vmatpush1.msra.mxu0 0.0
      %613 = vmatprep.subr.mxu0 0.0
      %614 = vmatpush1.msra.mxu0 0.0
      %615 = vmatprep.subr.mxu0 0.0
      %616 = vmatpush1.msra.mxu0 0.0
      %617 = vmatprep.subr.mxu0 0.0
      %618 = vmatpush1.msra.mxu0 0.0
      %619 = vmatprep.subr.mxu0 0.0
      %620 = vmatpush1.msra.mxu0 0.0
      %621 = vmatprep.subr.mxu0 0.0
      %622 = vmatpush1.msra.mxu0 0.0
      %623 = vmatprep.subr.mxu0 0.0
      %624 = vmatpush1.msra.mxu0 0.0
      %625 = vmatprep.subr.mxu0 0.0
      %626 = vmatpush1.msra.mxu0 %v563
      %627 = vmatprep.subr.mxu0 0.0
      %628 = vmatpush1.msra.mxu0 %v562
      %629 = vmatprep.subr.mxu0 0.0
      %630 = vmatpush2.msra.mxu0 0.0
      %631 = vmatprep.subr.mxu0 0.0
      %632 = vmatpush2.msra.mxu0 0.0
      %633 = vmatprep.subr.mxu0 0.0
      %634 = vmatpush2.msra.mxu0 0.0
      %635 = vmatprep.subr.mxu0 0.0
      %636 = vmatpush2.msra.mxu0 0.0
      %637 = vmatprep.subr.mxu0 0.0
      %638 = vmatpush2.msra.mxu0 0.0
      %639 = vmatprep.subr.mxu0 0.0
      %640 = vmatpush2.msra.mxu0 0.0
      %641 = vmatprep.subr.mxu0 0.0
      %642 = vmatpush2.msra.mxu0 0.0
      %643 = vmatprep.subr.mxu0 0.0
      %644 = vmatpush2.msra.mxu0 0.0
      %645 = vmatprep.subr.mxu0 0.0
      %646 = vmatpush2.msra.mxu0 0.0
      %647 = vmatprep.subr.mxu0 0.0
      %648 = vmatpush2.msra.mxu0 0.0
      %649 = vmatprep.subr.mxu0 0.0
      %650 = vmatpush2.msra.mxu0 0.0
      %651 = vmatprep.subr.mxu0 0.0
      %652 = vmatpush2.msra.mxu0 0.0
      %653 = vmatprep.subr.mxu0 0.0
      %654 = vmatpush2.msra.mxu0 0.0
      %655 = vmatprep.subr.mxu0 0.0
      %656 = vmatpush2.msra.mxu0 0.0
      %657 = vmatprep.subr.mxu0 0.0
      %658 = vmatpush2.msra.mxu0 0.0
      %659 = vmatprep.subr.mxu0 0.0
      %660 = vmatpush2.msra.mxu0 0.0
      %661 = vmatprep.mubr.f32.mxu0 0.0
      %662 = vmatmul.mubr.f32.gmra.mxu0 %v574
      %v663 = vpop.f32.mrf.mxu0
      %v664 = vadd.f32 0.0, %v663
      %v665 = vpop.f32.mrf.mxu0
      %666 = vmatprep.mubr.f32.mxu0 0.0
      %667 = vmatmul.mubr.f32.gmra.mxu0 %v577
      %v668 = vpop.f32.mrf.mxu0
      %v669 = vadd.f32 0.0, %v668
      %v670 = vpop.f32.mrf.mxu0
      %671 = vmatprep.mubr.f32.mxu0 0.0
      %672 = vmatmul.mubr.f32.gmra.mxu0 %v580
      %v673 = vpop.f32.mrf.mxu0
      %v674 = vadd.f32 0.0, %v673
      %v675 = vpop.f32.mrf.mxu0
      %676 = vmatprep.mubr.f32.mxu0 0.0
      %677 = vmatmul.mubr.f32.gmra.mxu0 %v583
      %v678 = vpop.f32.mrf.mxu0
      %v679 = vadd.f32 0.0, %v678
      %v680 = vpop.f32.mrf.mxu0
      %681 = vmatprep.mubr.f32.mxu0 0.0
      %682 = vmatmul.mubr.f32.gmra.mxu0 %v586
      %v683 = vpop.f32.mrf.mxu0
      %v684 = vadd.f32 0.0, %v683
      %v685 = vpop.f32.mrf.mxu0
      %686 = vmatprep.mubr.f32.mxu0 0.0
      %687 = vmatmul.mubr.f32.gmra.mxu0 %v589
      %v688 = vpop.f32.mrf.mxu0
      %v689 = vadd.f32 0.0, %v688
      %v690 = vpop.f32.mrf.mxu0
      %691 = vmatprep.mubr.f32.mxu0 0.0
      %692 = vmatmul.mubr.f32.gmra.mxu0 %v592
      %v693 = vpop.f32.mrf.mxu0
      %v694 = vadd.f32 0.0, %v693
      %v695 = vpop.f32.mrf.mxu0
      %696 = vmatprep.mubr.f32.mxu0 0.0
      %697 = vmatmul.mubr.f32.gmra.mxu0 %v595
      %v698 = vpop.f32.mrf.mxu0
      %v699 = vadd.f32 0.0, %v698
      %v700 = vpop.f32.mrf.mxu0
      %701 = vdwg.mxu0
      %v702 = vld [vmem:[%s2] sm:$0xff]
      %v703 = vld [vmem:[%s2 + $0x8] sm:$0xff]
      %v704 = vadd.f32 %v674, %v694
      %v705 = vadd.f32 %v679, %v699
      %s706 = scalar_lea.vmem %s2, 16
      %v707 = vld [vmem:[%s706] sm:$0xff]
      %v708 = vld [vmem:[%s706 + $0x8] sm:$0xff]
      %vm709 = vcmask 64512
      %v711 = vsel %vm709, %v704, 0
      %v714 = vsel %vm709, %v705, 0
      %716 = vmatprep.subr.mxu0 0.0
      %717 = vmatpush1.msra.mxu0 0.0
      %718 = vmatprep.subr.mxu0 0.0
      %719 = vmatpush1.msra.mxu0 0.0
      %720 = vmatprep.subr.mxu0 0.0
      %721 = vmatpush1.msra.mxu0 0.0
      %722 = vmatprep.subr.mxu0 0.0
      %723 = vmatpush1.msra.mxu0 0.0
      %724 = vmatprep.subr.mxu0 0.0
      %725 = vmatpush1.msra.mxu0 0.0
      %726 = vmatprep.subr.mxu0 0.0
      %727 = vmatpush1.msra.mxu0 0.0
      %728 = vmatprep.subr.mxu0 0.0
      %729 = vmatpush1.msra.mxu0 0.0
      %730 = vmatprep.subr.mxu0 0.0
      %731 = vmatpush1.msra.mxu0 0.0
      %732 = vmatprep.subr.mxu0 0.0
      %733 = vmatpush1.msra.mxu0 0.0
      %734 = vmatprep.subr.mxu0 0.0
      %735 = vmatpush1.msra.mxu0 0.0
      %736 = vmatprep.subr.mxu0 0.0
      %737 = vmatpush1.msra.mxu0 0.0
      %738 = vmatprep.subr.mxu0 0.0
      %739 = vmatpush1.msra.mxu0 0.0
      %740 = vmatprep.subr.mxu0 0.0
      %741 = vmatpush1.msra.mxu0 0.0
      %742 = vmatprep.subr.mxu0 0.0
      %743 = vmatpush1.msra.mxu0 0.0
      %744 = vmatprep.subr.mxu0 0.0
      %745 = vmatpush1.msra.mxu0 0.0
      %746 = vmatprep.subr.mxu0 %v708
      %747 = vmatpush1.msra.mxu0 %v707
      %748 = vmatprep.subr.mxu0 0.0
      %749 = vmatpush2.msra.mxu0 0.0
      %750 = vmatprep.subr.mxu0 0.0
      %751 = vmatpush2.msra.mxu0 0.0
      %752 = vmatprep.subr.mxu0 0.0
      %753 = vmatpush2.msra.mxu0 0.0
      %754 = vmatprep.subr.mxu0 0.0
      %755 = vmatpush2.msra.mxu0 0.0
      %756 = vmatprep.subr.mxu0 0.0
      %757 = vmatpush2.msra.mxu0 0.0
      %758 = vmatprep.subr.mxu0 0.0
      %759 = vmatpush2.msra.mxu0 0.0
      %760 = vmatprep.subr.mxu0 0.0
      %761 = vmatpush2.msra.mxu0 0.0
      %762 = vmatprep.subr.mxu0 0.0
      %763 = vmatpush2.msra.mxu0 0.0
      %764 = vmatprep.subr.mxu0 0.0
      %765 = vmatpush2.msra.mxu0 0.0
      %766 = vmatprep.subr.mxu0 0.0
      %767 = vmatpush2.msra.mxu0 0.0
      %768 = vmatprep.subr.mxu0 0.0
      %769 = vmatpush2.msra.mxu0 0.0
      %770 = vmatprep.subr.mxu0 0.0
      %771 = vmatpush2.msra.mxu0 0.0
      %772 = vmatprep.subr.mxu0 0.0
      %773 = vmatpush2.msra.mxu0 0.0
      %774 = vmatprep.subr.mxu0 0.0
      %775 = vmatpush2.msra.mxu0 0.0
      %776 = vmatprep.subr.mxu0 0.0
      %777 = vmatpush2.msra.mxu0 0.0
      %778 = vmatprep.subr.mxu0 0.0
      %779 = vmatpush2.msra.mxu0 0.0
      %780 = vmatprep.mubr.f32.mxu0 0.0
      %781 = vmatmul.mubr.f32.gmra.mxu0 %v711
      %v782 = vpop.f32.mrf.mxu0
      %v783 = vadd.f32 0.0, %v782
      %v784 = vpop.f32.mrf.mxu0
      %v785 = vadd.f32 0.0, %v784
      %786 = vmatprep.mubr.f32.mxu0 0.0
      %787 = vmatmul.mubr.f32.gmra.mxu0 %v714
      %v788 = vpop.f32.mrf.mxu0
      %v789 = vadd.f32 0.0, %v788
      %v790 = vpop.f32.mrf.mxu0
      %v791 = vadd.f32 0.0, %v790
      %792 = vdwg.mxu0
      %v794 = vsel %vm709, %v664, 0
      %v797 = vsel %vm709, %v669, 0
      %799 = vmatprep.subr.mxu0 0.0
      %800 = vmatpush1.msra.mxu0 0.0
      %801 = vmatprep.subr.mxu0 0.0
      %802 = vmatpush1.msra.mxu0 0.0
      %803 = vmatprep.subr.mxu0 0.0
      %804 = vmatpush1.msra.mxu0 0.0
      %805 = vmatprep.subr.mxu0 0.0
      %806 = vmatpush1.msra.mxu0 0.0
      %807 = vmatprep.subr.mxu0 0.0
      %808 = vmatpush1.msra.mxu0 0.0
      %809 = vmatprep.subr.mxu0 0.0
      %810 = vmatpush1.msra.mxu0 0.0
      %811 = vmatprep.subr.mxu0 0.0
      %812 = vmatpush1.msra.mxu0 0.0
      %813 = vmatprep.subr.mxu0 0.0
      %814 = vmatpush1.msra.mxu0 0.0
      %815 = vmatprep.subr.mxu0 0.0
      %816 = vmatpush1.msra.mxu0 0.0
      %817 = vmatprep.subr.mxu0 0.0
      %818 = vmatpush1.msra.mxu0 0.0
      %819 = vmatprep.subr.mxu0 0.0
      %820 = vmatpush1.msra.mxu0 0.0
      %821 = vmatprep.subr.mxu0 0.0
      %822 = vmatpush1.msra.mxu0 0.0
      %823 = vmatprep.subr.mxu0 0.0
      %824 = vmatpush1.msra.mxu0 0.0
      %825 = vmatprep.subr.mxu0 0.0
      %826 = vmatpush1.msra.mxu0 0.0
      %827 = vmatprep.subr.mxu0 0.0
      %828 = vmatpush1.msra.mxu0 0.0
      %829 = vmatprep.subr.mxu0 %v703
      %830 = vmatpush1.msra.mxu0 %v702
      %831 = vmatprep.subr.mxu0 0.0
      %832 = vmatpush2.msra.mxu0 0.0
      %833 = vmatprep.subr.mxu0 0.0
      %834 = vmatpush2.msra.mxu0 0.0
      %835 = vmatprep.subr.mxu0 0.0
      %836 = vmatpush2.msra.mxu0 0.0
      %837 = vmatprep.subr.mxu0 0.0
      %838 = vmatpush2.msra.mxu0 0.0
      %839 = vmatprep.subr.mxu0 0.0
      %840 = vmatpush2.msra.mxu0 0.0
      %841 = vmatprep.subr.mxu0 0.0
      %842 = vmatpush2.msra.mxu0 0.0
      %843 = vmatprep.subr.mxu0 0.0
      %844 = vmatpush2.msra.mxu0 0.0
      %845 = vmatprep.subr.mxu0 0.0
      %846 = vmatpush2.msra.mxu0 0.0
      %847 = vmatprep.subr.mxu0 0.0
      %848 = vmatpush2.msra.mxu0 0.0
      %849 = vmatprep.subr.mxu0 0.0
      %850 = vmatpush2.msra.mxu0 0.0
      %851 = vmatprep.subr.mxu0 0.0
      %852 = vmatpush2.msra.mxu0 0.0
      %853 = vmatprep.subr.mxu0 0.0
      %854 = vmatpush2.msra.mxu0 0.0
      %855 = vmatprep.subr.mxu0 0.0
      %856 = vmatpush2.msra.mxu0 0.0
      %857 = vmatprep.subr.mxu0 0.0
      %858 = vmatpush2.msra.mxu0 0.0
      %859 = vmatprep.subr.mxu0 0.0
      %860 = vmatpush2.msra.mxu0 0.0
      %861 = vmatprep.subr.mxu0 0.0
      %862 = vmatpush2.msra.mxu0 0.0
      %863 = vmatprep.mubr.f32.mxu0 0.0
      %864 = vmatmul.mubr.f32.gmra.mxu0 %v794
      %v865 = vpop.f32.mrf.mxu0
      %v866 = vadd.f32 %v783, %v865
      %v867 = vpop.f32.mrf.mxu0
      %v868 = vadd.f32 %v785, %v867
      %869 = vmatprep.mubr.f32.mxu0 0.0
      %870 = vmatmul.mubr.f32.gmra.mxu0 %v797
      %v871 = vpop.f32.mrf.mxu0
      %v872 = vadd.f32 %v789, %v871
      %v873 = vpop.f32.mrf.mxu0
      %v874 = vadd.f32 %v791, %v873
      %875 = vdwg.mxu0
      %s876 = scalar_lea.vmem %s2, 32
      %v877 = vld [vmem:[%s876] sm:$0xff]
      %v878 = vld [vmem:[%s876 + $0x8] sm:$0xff]
      %v880 = vsel %vm709, %v684, 0
      %v883 = vsel %vm709, %v689, 0
      %885 = vmatprep.subr.mxu0 0.0
      %886 = vmatpush1.msra.mxu0 0.0
      %887 = vmatprep.subr.mxu0 0.0
      %888 = vmatpush1.msra.mxu0 0.0
      %889 = vmatprep.subr.mxu0 0.0
      %890 = vmatpush1.msra.mxu0 0.0
      %891 = vmatprep.subr.mxu0 0.0
      %892 = vmatpush1.msra.mxu0 0.0
      %893 = vmatprep.subr.mxu0 0.0
      %894 = vmatpush1.msra.mxu0 0.0
      %895 = vmatprep.subr.mxu0 0.0
      %896 = vmatpush1.msra.mxu0 0.0
      %897 = vmatprep.subr.mxu0 0.0
      %898 = vmatpush1.msra.mxu0 0.0
      %899 = vmatprep.subr.mxu0 0.0
      %900 = vmatpush1.msra.mxu0 0.0
      %901 = vmatprep.subr.mxu0 0.0
      %902 = vmatpush1.msra.mxu0 0.0
      %903 = vmatprep.subr.mxu0 0.0
      %904 = vmatpush1.msra.mxu0 0.0
      %905 = vmatprep.subr.mxu0 0.0
      %906 = vmatpush1.msra.mxu0 0.0
      %907 = vmatprep.subr.mxu0 0.0
      %908 = vmatpush1.msra.mxu0 0.0
      %909 = vmatprep.subr.mxu0 0.0
      %910 = vmatpush1.msra.mxu0 0.0
      %911 = vmatprep.subr.mxu0 0.0
      %912 = vmatpush1.msra.mxu0 0.0
      %913 = vmatprep.subr.mxu0 0.0
      %914 = vmatpush1.msra.mxu0 0.0
      %915 = vmatprep.subr.mxu0 %v878
      %916 = vmatpush1.msra.mxu0 %v877
      %917 = vmatprep.subr.mxu0 0.0
      %918 = vmatpush2.msra.mxu0 0.0
      %919 = vmatprep.subr.mxu0 0.0
      %920 = vmatpush2.msra.mxu0 0.0
      %921 = vmatprep.subr.mxu0 0.0
      %922 = vmatpush2.msra.mxu0 0.0
      %923 = vmatprep.subr.mxu0 0.0
      %924 = vmatpush2.msra.mxu0 0.0
      %925 = vmatprep.subr.mxu0 0.0
      %926 = vmatpush2.msra.mxu0 0.0
      %927 = vmatprep.subr.mxu0 0.0
      %928 = vmatpush2.msra.mxu0 0.0
      %929 = vmatprep.subr.mxu0 0.0
      %930 = vmatpush2.msra.mxu0 0.0
      %931 = vmatprep.subr.mxu0 0.0
      %932 = vmatpush2.msra.mxu0 0.0
      %933 = vmatprep.subr.mxu0 0.0
      %934 = vmatpush2.msra.mxu0 0.0
      %935 = vmatprep.subr.mxu0 0.0
      %936 = vmatpush2.msra.mxu0 0.0
      %937 = vmatprep.subr.mxu0 0.0
      %938 = vmatpush2.msra.mxu0 0.0
      %939 = vmatprep.subr.mxu0 0.0
      %940 = vmatpush2.msra.mxu0 0.0
      %941 = vmatprep.subr.mxu0 0.0
      %942 = vmatpush2.msra.mxu0 0.0
      %943 = vmatprep.subr.mxu0 0.0
      %944 = vmatpush2.msra.mxu0 0.0
      %945 = vmatprep.subr.mxu0 0.0
      %946 = vmatpush2.msra.mxu0 0.0
      %947 = vmatprep.subr.mxu0 0.0
      %948 = vmatpush2.msra.mxu0 0.0
      %949 = vmatprep.mubr.f32.mxu0 0.0
      %950 = vmatmul.mubr.f32.gmra.mxu0 %v880
      %v951 = vpop.f32.mrf.mxu0
      %v952 = vadd.f32 0.0, %v951
      %v953 = vpop.f32.mrf.mxu0
      %v954 = vadd.f32 0.0, %v953
      %955 = vmatprep.mubr.f32.mxu0 0.0
      %956 = vmatmul.mubr.f32.gmra.mxu0 %v883
      %v957 = vpop.f32.mrf.mxu0
      %v958 = vadd.f32 0.0, %v957
      %v959 = vpop.f32.mrf.mxu0
      %v960 = vadd.f32 0.0, %v959
      %961 = vdwg.mxu0
      %v962 = vadd.f32 %v866, %v952
      %v963 = vadd.f32 %v868, %v954
      %v964 = vadd.f32 %v872, %v958
      %v965 = vadd.f32 %v874, %v960
      %v966 = vld [vmem:[%s3] sm:$0x3]
      %v968 = vlaneseq
      %v969 = vshrl.u32 %v968, 7
      %v970 = vsub.s32 0, %v969
      %v971 = vrot.slane %v966, %v970
      %v972 = vlaneseq
      %v973 = vshrl.u32 %v972, 7
      %v974 = vsub.s32 1, %v973
      %v975 = vrot.slane %v966, %v974
      %v978 = vadd.f32 %v962, %v971
      %v979 = vadd.f32 %v963, %v975
      %v980 = vadd.f32 %v964, %v971
      %v981 = vadd.f32 %v965, %v975
      %v982 = vsub.f32 %v694, %v674
      %v983 = vsub.f32 %v699, %v679
      %s984 = scalar_lea.vmem %s2, 48
      %v985 = vld [vmem:[%s984] sm:$0xff]
      %v986 = vld [vmem:[%s984 + $0x8] sm:$0xff]
      %s987 = scalar_lea.vmem %s3, 2
      %v988 = vld [vmem:[%s987] sm:$0x3]
      %v990 = vlaneseq
      %v991 = vshrl.u32 %v990, 7
      %v992 = vsub.s32 0, %v991
      %v993 = vrot.slane %v988, %v992
      %v994 = vlaneseq
      %v995 = vshrl.u32 %v994, 7
      %v996 = vsub.s32 1, %v995
      %v997 = vrot.slane %v988, %v996
      %v1001 = vsel %vm709, %v982, 0
      %v1004 = vsel %vm709, %v983, 0
      %1006 = vmatprep.subr.mxu0 0.0
      %1007 = vmatpush1.msra.mxu0 0.0
      %1008 = vmatprep.subr.mxu0 0.0
      %1009 = vmatpush1.msra.mxu0 0.0
      %1010 = vmatprep.subr.mxu0 0.0
      %1011 = vmatpush1.msra.mxu0 0.0
      %1012 = vmatprep.subr.mxu0 0.0
      %1013 = vmatpush1.msra.mxu0 0.0
      %1014 = vmatprep.subr.mxu0 0.0
      %1015 = vmatpush1.msra.mxu0 0.0
      %1016 = vmatprep.subr.mxu0 0.0
      %1017 = vmatpush1.msra.mxu0 0.0
      %1018 = vmatprep.subr.mxu0 0.0
      %1019 = vmatpush1.msra.mxu0 0.0
      %1020 = vmatprep.subr.mxu0 0.0
      %1021 = vmatpush1.msra.mxu0 0.0
      %1022 = vmatprep.subr.mxu0 0.0
      %1023 = vmatpush1.msra.mxu0 0.0
      %1024 = vmatprep.subr.mxu0 0.0
      %1025 = vmatpush1.msra.mxu0 0.0
      %1026 = vmatprep.subr.mxu0 0.0
      %1027 = vmatpush1.msra.mxu0 0.0
      %1028 = vmatprep.subr.mxu0 0.0
      %1029 = vmatpush1.msra.mxu0 0.0
      %1030 = vmatprep.subr.mxu0 0.0
      %1031 = vmatpush1.msra.mxu0 0.0
      %1032 = vmatprep.subr.mxu0 0.0
      %1033 = vmatpush1.msra.mxu0 0.0
      %1034 = vmatprep.subr.mxu0 0.0
      %1035 = vmatpush1.msra.mxu0 0.0
      %1036 = vmatprep.subr.mxu0 %v986
      %1037 = vmatpush1.msra.mxu0 %v985
      %1038 = vmatprep.subr.mxu0 0.0
      %1039 = vmatpush2.msra.mxu0 0.0
      %1040 = vmatprep.subr.mxu0 0.0
      %1041 = vmatpush2.msra.mxu0 0.0
      %1042 = vmatprep.subr.mxu0 0.0
      %1043 = vmatpush2.msra.mxu0 0.0
      %1044 = vmatprep.subr.mxu0 0.0
      %1045 = vmatpush2.msra.mxu0 0.0
      %1046 = vmatprep.subr.mxu0 0.0
      %1047 = vmatpush2.msra.mxu0 0.0
      %1048 = vmatprep.subr.mxu0 0.0
      %1049 = vmatpush2.msra.mxu0 0.0
      %1050 = vmatprep.subr.mxu0 0.0
      %1051 = vmatpush2.msra.mxu0 0.0
      %1052 = vmatprep.subr.mxu0 0.0
      %1053 = vmatpush2.msra.mxu0 0.0
      %1054 = vmatprep.subr.mxu0 0.0
      %1055 = vmatpush2.msra.mxu0 0.0
      %1056 = vmatprep.subr.mxu0 0.0
      %1057 = vmatpush2.msra.mxu0 0.0
      %1058 = vmatprep.subr.mxu0 0.0
      %1059 = vmatpush2.msra.mxu0 0.0
      %1060 = vmatprep.subr.mxu0 0.0
      %1061 = vmatpush2.msra.mxu0 0.0
      %1062 = vmatprep.subr.mxu0 0.0
      %1063 = vmatpush2.msra.mxu0 0.0
      %1064 = vmatprep.subr.mxu0 0.0
      %1065 = vmatpush2.msra.mxu0 0.0
      %1066 = vmatprep.subr.mxu0 0.0
      %1067 = vmatpush2.msra.mxu0 0.0
      %1068 = vmatprep.subr.mxu0 0.0
      %1069 = vmatpush2.msra.mxu0 0.0
      %1070 = vmatprep.mubr.f32.mxu0 0.0
      %1071 = vmatmul.mubr.f32.gmra.mxu0 %v1001
      %v1072 = vpop.f32.mrf.mxu0
      %v1073 = vadd.f32 %v993, %v1072
      %v1074 = vpop.f32.mrf.mxu0
      %v1075 = vadd.f32 %v997, %v1074
      %1076 = vmatprep.mubr.f32.mxu0 0.0
      %1077 = vmatmul.mubr.f32.gmra.mxu0 %v1004
      %v1078 = vpop.f32.mrf.mxu0
      %v1079 = vadd.f32 %v993, %v1078
      %v1080 = vpop.f32.mrf.mxu0
      %v1081 = vadd.f32 %v997, %v1080
      %1082 = vdwg.mxu0
      %v1083 = vxor.u32 %v979, 2147483648
      %v1084 = vxor.u32 %v981, 2147483648
      %v1085 = vmul.f32 %v1083, 1.442695
      %v1086 = vpow.pop %v1085
      %v1087 = vmul.f32 %v1084, 1.442695
      %v1088 = vpow.pop %v1087
      %v1089 = vadd.f32 %v1086, 1.0
      %v1090 = vadd.f32 %v1088, 1.0
      %v1091 = vrcp.pop %v1089
      %v1092 = vmul.f32 1.0, %v1091
      %v1093 = vrcp.pop %v1090
      %v1094 = vmul.f32 1.0, %v1093
      %v1095 = vmul.f32 %v978, %v1092
      %v1096 = vmul.f32 %v980, %v1094
      %v1097 = vxor.u32 %v1075, 2147483648
      %v1098 = vxor.u32 %v1081, 2147483648
      %v1099 = vmul.f32 %v1097, 1.442695
      %v1100 = vpow.pop %v1099
      %v1101 = vmul.f32 %v1098, 1.442695
      %v1102 = vpow.pop %v1101
      %v1103 = vadd.f32 %v1100, 1.0
      %v1104 = vadd.f32 %v1102, 1.0
      %v1105 = vrcp.pop %v1103
      %v1106 = vmul.f32 1.0, %v1105
      %v1107 = vrcp.pop %v1104
      %v1108 = vmul.f32 1.0, %v1107
      %v1109 = vmul.f32 %v1073, %v1106
      %v1110 = vmul.f32 %v1079, %v1108
      %v1111 = vld [vmem:[%s4] sm:$0xff]
      %v1112 = vld [vmem:[%s4 + $0x8] sm:$0xff]
      %v1113 = vld [vmem:[%s4 + $0x10] sm:$0xff]
      %v1114 = vld [vmem:[%s4 + $0x18] sm:$0xff]
      %v1115 = vld [vmem:[%s4 + $0x20] sm:$0xff]
      %v1116 = vld [vmem:[%s4 + $0x28] sm:$0xff]
      %v1117 = vld [vmem:[%s4 + $0x30] sm:$0xff]
      %v1118 = vld [vmem:[%s4 + $0x38] sm:$0xff]
      %v1119 = vld [vmem:[%s4 + $0x40] sm:$0xff]
      %v1120 = vld [vmem:[%s4 + $0x48] sm:$0xff]
      %v1121 = vld [vmem:[%s4 + $0x50] sm:$0xff]
      %v1122 = vld [vmem:[%s4 + $0x58] sm:$0xff]
      %v1123 = vld [vmem:[%s4 + $0x60] sm:$0xff]
      %v1124 = vld [vmem:[%s4 + $0x68] sm:$0xff]
      %v1125 = vld [vmem:[%s4 + $0x70] sm:$0xff]
      %v1126 = vld [vmem:[%s4 + $0x78] sm:$0xff]
      %v1127 = vld [vmem:[%s4 + $0x80] sm:$0xff]
      %v1128 = vld [vmem:[%s4 + $0x88] sm:$0xff]
      %v1129 = vld [vmem:[%s4 + $0x90] sm:$0xff]
      %v1130 = vld [vmem:[%s4 + $0x98] sm:$0xff]
      %v1131 = vld [vmem:[%s4 + $0xa0] sm:$0xff]
      %v1132 = vld [vmem:[%s4 + $0xa8] sm:$0xff]
      %v1133 = vld [vmem:[%s4 + $0xb0] sm:$0xff]
      %v1134 = vld [vmem:[%s4 + $0xb8] sm:$0xff]
      %v1135 = vld [vmem:[%s4 + $0xc0] sm:$0xff]
      %v1136 = vld [vmem:[%s4 + $0xc8] sm:$0xff]
      %v1137 = vld [vmem:[%s4 + $0xd0] sm:$0xff]
      %v1138 = vld [vmem:[%s4 + $0xd8] sm:$0xff]
      %v1139 = vld [vmem:[%s4 + $0xe0] sm:$0xff]
      %v1140 = vld [vmem:[%s4 + $0xe8] sm:$0xff]
      %v1141 = vld [vmem:[%s4 + $0xf0] sm:$0xff]
      %v1142 = vld [vmem:[%s4 + $0xf8] sm:$0xff]
      %v1143 = vld [vmem:[%s5] sm:$0x3]
      %v1145 = vlaneseq
      %v1146 = vshrl.u32 %v1145, 7
      %v1147 = vsub.s32 0, %v1146
      %v1148 = vrot.slane %v1143, %v1147
      %v1149 = vlaneseq
      %v1150 = vshrl.u32 %v1149, 7
      %v1151 = vsub.s32 1, %v1150
      %v1152 = vrot.slane %v1143, %v1151
      %1155 = vmatprep.subr.mxu0 %v1142
      %1156 = vmatpush1.msra.mxu0 %v1141
      %1157 = vmatprep.subr.mxu0 %v1140
      %1158 = vmatpush1.msra.mxu0 %v1139
      %1159 = vmatprep.subr.mxu0 %v1138
      %1160 = vmatpush1.msra.mxu0 %v1137
      %1161 = vmatprep.subr.mxu0 %v1136
      %1162 = vmatpush1.msra.mxu0 %v1135
      %1163 = vmatprep.subr.mxu0 %v1134
      %1164 = vmatpush1.msra.mxu0 %v1133
      %1165 = vmatprep.subr.mxu0 %v1132
      %1166 = vmatpush1.msra.mxu0 %v1131
      %1167 = vmatprep.subr.mxu0 %v1130
      %1168 = vmatpush1.msra.mxu0 %v1129
      %1169 = vmatprep.subr.mxu0 %v1128
      %1170 = vmatpush1.msra.mxu0 %v1127
      %1171 = vmatprep.subr.mxu0 %v1126
      %1172 = vmatpush1.msra.mxu0 %v1125
      %1173 = vmatprep.subr.mxu0 %v1124
      %1174 = vmatpush1.msra.mxu0 %v1123
      %1175 = vmatprep.subr.mxu0 %v1122
      %1176 = vmatpush1.msra.mxu0 %v1121
      %1177 = vmatprep.subr.mxu0 %v1120
      %1178 = vmatpush1.msra.mxu0 %v1119
      %1179 = vmatprep.subr.mxu0 %v1118
      %1180 = vmatpush1.msra.mxu0 %v1117
      %1181 = vmatprep.subr.mxu0 %v1116
      %1182 = vmatpush1.msra.mxu0 %v1115
      %1183 = vmatprep.subr.mxu0 %v1114
      %1184 = vmatpush1.msra.mxu0 %v1113
      %1185 = vmatprep.subr.mxu0 %v1112
      %1186 = vmatpush1.msra.mxu0 %v1111
      %1187 = vmatprep.subr.mxu0 0.0
      %1188 = vmatpush2.msra.mxu0 0.0
      %1189 = vmatprep.subr.mxu0 0.0
      %1190 = vmatpush2.msra.mxu0 0.0
      %1191 = vmatprep.subr.mxu0 0.0
      %1192 = vmatpush2.msra.mxu0 0.0
      %1193 = vmatprep.subr.mxu0 0.0
      %1194 = vmatpush2.msra.mxu0 0.0
      %1195 = vmatprep.subr.mxu0 0.0
      %1196 = vmatpush2.msra.mxu0 0.0
      %1197 = vmatprep.subr.mxu0 0.0
      %1198 = vmatpush2.msra.mxu0 0.0
      %1199 = vmatprep.subr.mxu0 0.0
      %1200 = vmatpush2.msra.mxu0 0.0
      %1201 = vmatprep.subr.mxu0 0.0
      %1202 = vmatpush2.msra.mxu0 0.0
      %1203 = vmatprep.subr.mxu0 0.0
      %1204 = vmatpush2.msra.mxu0 0.0
      %1205 = vmatprep.subr.mxu0 0.0
      %1206 = vmatpush2.msra.mxu0 0.0
      %1207 = vmatprep.subr.mxu0 0.0
      %1208 = vmatpush2.msra.mxu0 0.0
      %1209 = vmatprep.subr.mxu0 0.0
      %1210 = vmatpush2.msra.mxu0 0.0
      %1211 = vmatprep.subr.mxu0 0.0
      %1212 = vmatpush2.msra.mxu0 0.0
      %1213 = vmatprep.subr.mxu0 0.0
      %1214 = vmatpush2.msra.mxu0 0.0
      %1215 = vmatprep.subr.mxu0 0.0
      %1216 = vmatpush2.msra.mxu0 0.0
      %1217 = vmatprep.subr.mxu0 0.0
      %1218 = vmatpush2.msra.mxu0 0.0
      %1219 = vmatprep.mubr.f32.mxu0 0.0
      %1220 = vmatmul.mubr.f32.gmra.mxu0 %v1095
      %v1221 = vpop.f32.mrf.mxu0
      %v1222 = vadd.f32 %v1148, %v1221
      %v1223 = vpop.f32.mrf.mxu0
      %v1224 = vadd.f32 %v1152, %v1223
      %1225 = vmatprep.mubr.f32.mxu0 0.0
      %1226 = vmatmul.mubr.f32.gmra.mxu0 %v1096
      %v1227 = vpop.f32.mrf.mxu0
      %v1228 = vadd.f32 %v1148, %v1227
      %v1229 = vpop.f32.mrf.mxu0
      %v1230 = vadd.f32 %v1152, %v1229
      %1231 = vdwg.mxu0
      %v1232 = vxor.u32 %v1224, 2147483648
      %v1233 = vxor.u32 %v1230, 2147483648
      %v1234 = vmul.f32 %v1232, 1.442695
      %v1235 = vpow.pop %v1234
      %v1236 = vmul.f32 %v1233, 1.442695
      %v1237 = vpow.pop %v1236
      %v1238 = vadd.f32 %v1235, 1.0
      %v1239 = vadd.f32 %v1237, 1.0
      %v1240 = vrcp.pop %v1238
      %v1241 = vmul.f32 1.0, %v1240
      %v1242 = vrcp.pop %v1239
      %v1243 = vmul.f32 1.0, %v1242
      %v1244 = vmul.f32 %v1222, %v1241
      %v1245 = vmul.f32 %v1228, %v1243
      %s1246 = scalar_lea.vmem %s4, 256
      %v1247 = vld [vmem:[%s1246] sm:$0xff]
      %v1248 = vld [vmem:[%s1246 + $0x8] sm:$0xff]
      %v1249 = vld [vmem:[%s1246 + $0x10] sm:$0xff]
      %v1250 = vld [vmem:[%s1246 + $0x18] sm:$0xff]
      %v1251 = vld [vmem:[%s1246 + $0x20] sm:$0xff]
      %v1252 = vld [vmem:[%s1246 + $0x28] sm:$0xff]
      %v1253 = vld [vmem:[%s1246 + $0x30] sm:$0xff]
      %v1254 = vld [vmem:[%s1246 + $0x38] sm:$0xff]
      %v1255 = vld [vmem:[%s1246 + $0x40] sm:$0xff]
      %v1256 = vld [vmem:[%s1246 + $0x48] sm:$0xff]
      %v1257 = vld [vmem:[%s1246 + $0x50] sm:$0xff]
      %v1258 = vld [vmem:[%s1246 + $0x58] sm:$0xff]
      %v1259 = vld [vmem:[%s1246 + $0x60] sm:$0xff]
      %v1260 = vld [vmem:[%s1246 + $0x68] sm:$0xff]
      %v1261 = vld [vmem:[%s1246 + $0x70] sm:$0xff]
      %v1262 = vld [vmem:[%s1246 + $0x78] sm:$0xff]
      %v1263 = vld [vmem:[%s1246 + $0x80] sm:$0xff]
      %v1264 = vld [vmem:[%s1246 + $0x88] sm:$0xff]
      %v1265 = vld [vmem:[%s1246 + $0x90] sm:$0xff]
      %v1266 = vld [vmem:[%s1246 + $0x98] sm:$0xff]
      %v1267 = vld [vmem:[%s1246 + $0xa0] sm:$0xff]
      %v1268 = vld [vmem:[%s1246 + $0xa8] sm:$0xff]
      %v1269 = vld [vmem:[%s1246 + $0xb0] sm:$0xff]
      %v1270 = vld [vmem:[%s1246 + $0xb8] sm:$0xff]
      %v1271 = vld [vmem:[%s1246 + $0xc0] sm:$0xff]
      %v1272 = vld [vmem:[%s1246 + $0xc8] sm:$0xff]
      %v1273 = vld [vmem:[%s1246 + $0xd0] sm:$0xff]
      %v1274 = vld [vmem:[%s1246 + $0xd8] sm:$0xff]
      %v1275 = vld [vmem:[%s1246 + $0xe0] sm:$0xff]
      %v1276 = vld [vmem:[%s1246 + $0xe8] sm:$0xff]
      %v1277 = vld [vmem:[%s1246 + $0xf0] sm:$0xff]
      %v1278 = vld [vmem:[%s1246 + $0xf8] sm:$0xff]
      %s1279 = scalar_lea.vmem %s5, 2
      %v1280 = vld [vmem:[%s1279] sm:$0x3]
      %v1282 = vlaneseq
      %v1283 = vshrl.u32 %v1282, 7
      %v1284 = vsub.s32 0, %v1283
      %v1285 = vrot.slane %v1280, %v1284
      %v1286 = vlaneseq
      %v1287 = vshrl.u32 %v1286, 7
      %v1288 = vsub.s32 1, %v1287
      %v1289 = vrot.slane %v1280, %v1288
      %1292 = vmatprep.subr.mxu0 %v1278
      %1293 = vmatpush1.msra.mxu0 %v1277
      %1294 = vmatprep.subr.mxu0 %v1276
      %1295 = vmatpush1.msra.mxu0 %v1275
      %1296 = vmatprep.subr.mxu0 %v1274
      %1297 = vmatpush1.msra.mxu0 %v1273
      %1298 = vmatprep.subr.mxu0 %v1272
      %1299 = vmatpush1.msra.mxu0 %v1271
      %1300 = vmatprep.subr.mxu0 %v1270
      %1301 = vmatpush1.msra.mxu0 %v1269
      %1302 = vmatprep.subr.mxu0 %v1268
      %1303 = vmatpush1.msra.mxu0 %v1267
      %1304 = vmatprep.subr.mxu0 %v1266
      %1305 = vmatpush1.msra.mxu0 %v1265
      %1306 = vmatprep.subr.mxu0 %v1264
      %1307 = vmatpush1.msra.mxu0 %v1263
      %1308 = vmatprep.subr.mxu0 %v1262
      %1309 = vmatpush1.msra.mxu0 %v1261
      %1310 = vmatprep.subr.mxu0 %v1260
      %1311 = vmatpush1.msra.mxu0 %v1259
      %1312 = vmatprep.subr.mxu0 %v1258
      %1313 = vmatpush1.msra.mxu0 %v1257
      %1314 = vmatprep.subr.mxu0 %v1256
      %1315 = vmatpush1.msra.mxu0 %v1255
      %1316 = vmatprep.subr.mxu0 %v1254
      %1317 = vmatpush1.msra.mxu0 %v1253
      %1318 = vmatprep.subr.mxu0 %v1252
      %1319 = vmatpush1.msra.mxu0 %v1251
      %1320 = vmatprep.subr.mxu0 %v1250
      %1321 = vmatpush1.msra.mxu0 %v1249
      %1322 = vmatprep.subr.mxu0 %v1248
      %1323 = vmatpush1.msra.mxu0 %v1247
      %1324 = vmatprep.subr.mxu0 0.0
      %1325 = vmatpush2.msra.mxu0 0.0
      %1326 = vmatprep.subr.mxu0 0.0
      %1327 = vmatpush2.msra.mxu0 0.0
      %1328 = vmatprep.subr.mxu0 0.0
      %1329 = vmatpush2.msra.mxu0 0.0
      %1330 = vmatprep.subr.mxu0 0.0
      %1331 = vmatpush2.msra.mxu0 0.0
      %1332 = vmatprep.subr.mxu0 0.0
      %1333 = vmatpush2.msra.mxu0 0.0
      %1334 = vmatprep.subr.mxu0 0.0
      %1335 = vmatpush2.msra.mxu0 0.0
      %1336 = vmatprep.subr.mxu0 0.0
      %1337 = vmatpush2.msra.mxu0 0.0
      %1338 = vmatprep.subr.mxu0 0.0
      %1339 = vmatpush2.msra.mxu0 0.0
      %1340 = vmatprep.subr.mxu0 0.0
      %1341 = vmatpush2.msra.mxu0 0.0
      %1342 = vmatprep.subr.mxu0 0.0
      %1343 = vmatpush2.msra.mxu0 0.0
      %1344 = vmatprep.subr.mxu0 0.0
      %1345 = vmatpush2.msra.mxu0 0.0
      %1346 = vmatprep.subr.mxu0 0.0
      %1347 = vmatpush2.msra.mxu0 0.0
      %1348 = vmatprep.subr.mxu0 0.0
      %1349 = vmatpush2.msra.mxu0 0.0
      %1350 = vmatprep.subr.mxu0 0.0
      %1351 = vmatpush2.msra.mxu0 0.0
      %1352 = vmatprep.subr.mxu0 0.0
      %1353 = vmatpush2.msra.mxu0 0.0
      %1354 = vmatprep.subr.mxu0 0.0
      %1355 = vmatpush2.msra.mxu0 0.0
      %1356 = vmatprep.mubr.f32.mxu0 0.0
      %1357 = vmatmul.mubr.f32.gmra.mxu0 %v1109
      %v1358 = vpop.f32.mrf.mxu0
      %v1359 = vadd.f32 %v1285, %v1358
      %v1360 = vpop.f32.mrf.mxu0
      %v1361 = vadd.f32 %v1289, %v1360
      %1362 = vmatprep.mubr.f32.mxu0 0.0
      %1363 = vmatmul.mubr.f32.gmra.mxu0 %v1110
      %v1364 = vpop.f32.mrf.mxu0
      %v1365 = vadd.f32 %v1285, %v1364
      %v1366 = vpop.f32.mrf.mxu0
      %v1367 = vadd.f32 %v1289, %v1366
      %1368 = vdwg.mxu0
      %v1369 = vxor.u32 %v1361, 2147483648
      %v1370 = vxor.u32 %v1367, 2147483648
      %v1371 = vmul.f32 %v1369, 1.442695
      %v1372 = vpow.pop %v1371
      %v1373 = vmul.f32 %v1370, 1.442695
      %v1374 = vpow.pop %v1373
      %v1375 = vadd.f32 %v1372, 1.0
      %v1376 = vadd.f32 %v1374, 1.0
      %v1377 = vrcp.pop %v1375
      %v1378 = vmul.f32 1.0, %v1377
      %v1379 = vrcp.pop %v1376
      %v1380 = vmul.f32 1.0, %v1379
      %v1381 = vmul.f32 %v1359, %v1378
      %v1382 = vmul.f32 %v1365, %v1380
      %s1383 = scalar_lea.vmem %s4, 512
      %v1384 = vld [vmem:[%s1383] sm:$0xff]
      %v1385 = vld [vmem:[%s1383 + $0x8] sm:$0xff]
      %v1386 = vld [vmem:[%s1383 + $0x10] sm:$0xff]
      %v1387 = vld [vmem:[%s1383 + $0x18] sm:$0xff]
      %v1388 = vld [vmem:[%s1383 + $0x20] sm:$0xff]
      %v1389 = vld [vmem:[%s1383 + $0x28] sm:$0xff]
      %v1390 = vld [vmem:[%s1383 + $0x30] sm:$0xff]
      %v1391 = vld [vmem:[%s1383 + $0x38] sm:$0xff]
      %v1392 = vld [vmem:[%s1383 + $0x40] sm:$0xff]
      %v1393 = vld [vmem:[%s1383 + $0x48] sm:$0xff]
      %v1394 = vld [vmem:[%s1383 + $0x50] sm:$0xff]
      %v1395 = vld [vmem:[%s1383 + $0x58] sm:$0xff]
      %v1396 = vld [vmem:[%s1383 + $0x60] sm:$0xff]
      %v1397 = vld [vmem:[%s1383 + $0x68] sm:$0xff]
      %v1398 = vld [vmem:[%s1383 + $0x70] sm:$0xff]
      %v1399 = vld [vmem:[%s1383 + $0x78] sm:$0xff]
      %v1400 = vld [vmem:[%s1383 + $0x80] sm:$0xff]
      %v1401 = vld [vmem:[%s1383 + $0x88] sm:$0xff]
      %v1402 = vld [vmem:[%s1383 + $0x90] sm:$0xff]
      %v1403 = vld [vmem:[%s1383 + $0x98] sm:$0xff]
      %v1404 = vld [vmem:[%s1383 + $0xa0] sm:$0xff]
      %v1405 = vld [vmem:[%s1383 + $0xa8] sm:$0xff]
      %v1406 = vld [vmem:[%s1383 + $0xb0] sm:$0xff]
      %v1407 = vld [vmem:[%s1383 + $0xb8] sm:$0xff]
      %v1408 = vld [vmem:[%s1383 + $0xc0] sm:$0xff]
      %v1409 = vld [vmem:[%s1383 + $0xc8] sm:$0xff]
      %v1410 = vld [vmem:[%s1383 + $0xd0] sm:$0xff]
      %v1411 = vld [vmem:[%s1383 + $0xd8] sm:$0xff]
      %v1412 = vld [vmem:[%s1383 + $0xe0] sm:$0xff]
      %v1413 = vld [vmem:[%s1383 + $0xe8] sm:$0xff]
      %v1414 = vld [vmem:[%s1383 + $0xf0] sm:$0xff]
      %v1415 = vld [vmem:[%s1383 + $0xf8] sm:$0xff]
      %s1416 = scalar_lea.vmem %s5, 4
      %v1417 = vld [vmem:[%s1416] sm:$0x3]
      %v1419 = vlaneseq
      %v1420 = vshrl.u32 %v1419, 7
      %v1421 = vsub.s32 0, %v1420
      %v1422 = vrot.slane %v1417, %v1421
      %v1423 = vlaneseq
      %v1424 = vshrl.u32 %v1423, 7
      %v1425 = vsub.s32 1, %v1424
      %v1426 = vrot.slane %v1417, %v1425
      %1429 = vmatprep.subr.mxu0 %v1415
      %1430 = vmatpush1.msra.mxu0 %v1414
      %1431 = vmatprep.subr.mxu0 %v1413
      %1432 = vmatpush1.msra.mxu0 %v1412
      %1433 = vmatprep.subr.mxu0 %v1411
      %1434 = vmatpush1.msra.mxu0 %v1410
      %1435 = vmatprep.subr.mxu0 %v1409
      %1436 = vmatpush1.msra.mxu0 %v1408
      %1437 = vmatprep.subr.mxu0 %v1407
      %1438 = vmatpush1.msra.mxu0 %v1406
      %1439 = vmatprep.subr.mxu0 %v1405
      %1440 = vmatpush1.msra.mxu0 %v1404
      %1441 = vmatprep.subr.mxu0 %v1403
      %1442 = vmatpush1.msra.mxu0 %v1402
      %1443 = vmatprep.subr.mxu0 %v1401
      %1444 = vmatpush1.msra.mxu0 %v1400
      %1445 = vmatprep.subr.mxu0 %v1399
      %1446 = vmatpush1.msra.mxu0 %v1398
      %1447 = vmatprep.subr.mxu0 %v1397
      %1448 = vmatpush1.msra.mxu0 %v1396
      %1449 = vmatprep.subr.mxu0 %v1395
      %1450 = vmatpush1.msra.mxu0 %v1394
      %1451 = vmatprep.subr.mxu0 %v1393
      %1452 = vmatpush1.msra.mxu0 %v1392
      %1453 = vmatprep.subr.mxu0 %v1391
      %1454 = vmatpush1.msra.mxu0 %v1390
      %1455 = vmatprep.subr.mxu0 %v1389
      %1456 = vmatpush1.msra.mxu0 %v1388
      %1457 = vmatprep.subr.mxu0 %v1387
      %1458 = vmatpush1.msra.mxu0 %v1386
      %1459 = vmatprep.subr.mxu0 %v1385
      %1460 = vmatpush1.msra.mxu0 %v1384
      %1461 = vmatprep.subr.mxu0 0.0
      %1462 = vmatpush2.msra.mxu0 0.0
      %1463 = vmatprep.subr.mxu0 0.0
      %1464 = vmatpush2.msra.mxu0 0.0
      %1465 = vmatprep.subr.mxu0 0.0
      %1466 = vmatpush2.msra.mxu0 0.0
      %1467 = vmatprep.subr.mxu0 0.0
      %1468 = vmatpush2.msra.mxu0 0.0
      %1469 = vmatprep.subr.mxu0 0.0
      %1470 = vmatpush2.msra.mxu0 0.0
      %1471 = vmatprep.subr.mxu0 0.0
      %1472 = vmatpush2.msra.mxu0 0.0
      %1473 = vmatprep.subr.mxu0 0.0
      %1474 = vmatpush2.msra.mxu0 0.0
      %1475 = vmatprep.subr.mxu0 0.0
      %1476 = vmatpush2.msra.mxu0 0.0
      %1477 = vmatprep.subr.mxu0 0.0
      %1478 = vmatpush2.msra.mxu0 0.0
      %1479 = vmatprep.subr.mxu0 0.0
      %1480 = vmatpush2.msra.mxu0 0.0
      %1481 = vmatprep.subr.mxu0 0.0
      %1482 = vmatpush2.msra.mxu0 0.0
      %1483 = vmatprep.subr.mxu0 0.0
      %1484 = vmatpush2.msra.mxu0 0.0
      %1485 = vmatprep.subr.mxu0 0.0
      %1486 = vmatpush2.msra.mxu0 0.0
      %1487 = vmatprep.subr.mxu0 0.0
      %1488 = vmatpush2.msra.mxu0 0.0
      %1489 = vmatprep.subr.mxu0 0.0
      %1490 = vmatpush2.msra.mxu0 0.0
      %1491 = vmatprep.subr.mxu0 0.0
      %1492 = vmatpush2.msra.mxu0 0.0
      %1493 = vmatprep.mubr.f32.mxu0 0.0
      %1494 = vmatmul.mubr.f32.gmra.mxu0 %v1244
      %v1495 = vpop.f32.mrf.mxu0
      %v1496 = vadd.f32 %v1422, %v1495
      %v1497 = vpop.f32.mrf.mxu0
      %v1498 = vadd.f32 %v1426, %v1497
      %1499 = vmatprep.mubr.f32.mxu0 0.0
      %1500 = vmatmul.mubr.f32.gmra.mxu0 %v1245
      %v1501 = vpop.f32.mrf.mxu0
      %v1502 = vadd.f32 %v1422, %v1501
      %v1503 = vpop.f32.mrf.mxu0
      %v1504 = vadd.f32 %v1426, %v1503
      %1505 = vdwg.mxu0
      %v1506 = vxor.u32 %v1498, 2147483648
      %v1507 = vxor.u32 %v1504, 2147483648
      %v1508 = vmul.f32 %v1506, 1.442695
      %v1509 = vpow.pop %v1508
      %v1510 = vmul.f32 %v1507, 1.442695
      %v1511 = vpow.pop %v1510
      %v1512 = vadd.f32 %v1509, 1.0
      %v1513 = vadd.f32 %v1511, 1.0
      %v1514 = vrcp.pop %v1512
      %v1515 = vmul.f32 1.0, %v1514
      %v1516 = vrcp.pop %v1513
      %v1517 = vmul.f32 1.0, %v1516
      %v1518 = vmul.f32 %v1496, %v1515
      %v1519 = vmul.f32 %v1502, %v1517
      %s1520 = scalar_lea.vmem %s4, 768
      %v1521 = vld [vmem:[%s1520] sm:$0xff]
      %v1522 = vld [vmem:[%s1520 + $0x8] sm:$0xff]
      %v1523 = vld [vmem:[%s1520 + $0x10] sm:$0xff]
      %v1524 = vld [vmem:[%s1520 + $0x18] sm:$0xff]
      %v1525 = vld [vmem:[%s1520 + $0x20] sm:$0xff]
      %v1526 = vld [vmem:[%s1520 + $0x28] sm:$0xff]
      %v1527 = vld [vmem:[%s1520 + $0x30] sm:$0xff]
      %v1528 = vld [vmem:[%s1520 + $0x38] sm:$0xff]
      %v1529 = vld [vmem:[%s1520 + $0x40] sm:$0xff]
      %v1530 = vld [vmem:[%s1520 + $0x48] sm:$0xff]
      %v1531 = vld [vmem:[%s1520 + $0x50] sm:$0xff]
      %v1532 = vld [vmem:[%s1520 + $0x58] sm:$0xff]
      %v1533 = vld [vmem:[%s1520 + $0x60] sm:$0xff]
      %v1534 = vld [vmem:[%s1520 + $0x68] sm:$0xff]
      %v1535 = vld [vmem:[%s1520 + $0x70] sm:$0xff]
      %v1536 = vld [vmem:[%s1520 + $0x78] sm:$0xff]
      %v1537 = vld [vmem:[%s1520 + $0x80] sm:$0xff]
      %v1538 = vld [vmem:[%s1520 + $0x88] sm:$0xff]
      %v1539 = vld [vmem:[%s1520 + $0x90] sm:$0xff]
      %v1540 = vld [vmem:[%s1520 + $0x98] sm:$0xff]
      %v1541 = vld [vmem:[%s1520 + $0xa0] sm:$0xff]
      %v1542 = vld [vmem:[%s1520 + $0xa8] sm:$0xff]
      %v1543 = vld [vmem:[%s1520 + $0xb0] sm:$0xff]
      %v1544 = vld [vmem:[%s1520 + $0xb8] sm:$0xff]
      %v1545 = vld [vmem:[%s1520 + $0xc0] sm:$0xff]
      %v1546 = vld [vmem:[%s1520 + $0xc8] sm:$0xff]
      %v1547 = vld [vmem:[%s1520 + $0xd0] sm:$0xff]
      %v1548 = vld [vmem:[%s1520 + $0xd8] sm:$0xff]
      %v1549 = vld [vmem:[%s1520 + $0xe0] sm:$0xff]
      %v1550 = vld [vmem:[%s1520 + $0xe8] sm:$0xff]
      %v1551 = vld [vmem:[%s1520 + $0xf0] sm:$0xff]
      %v1552 = vld [vmem:[%s1520 + $0xf8] sm:$0xff]
      %s1553 = scalar_lea.vmem %s5, 6
      %v1554 = vld [vmem:[%s1553] sm:$0x3]
      %v1556 = vlaneseq
      %v1557 = vshrl.u32 %v1556, 7
      %v1558 = vsub.s32 0, %v1557
      %v1559 = vrot.slane %v1554, %v1558
      %v1560 = vlaneseq
      %v1561 = vshrl.u32 %v1560, 7
      %v1562 = vsub.s32 1, %v1561
      %v1563 = vrot.slane %v1554, %v1562
      %1566 = vmatprep.subr.mxu0 %v1552
      %1567 = vmatpush1.msra.mxu0 %v1551
      %1568 = vmatprep.subr.mxu0 %v1550
      %1569 = vmatpush1.msra.mxu0 %v1549
      %1570 = vmatprep.subr.mxu0 %v1548
      %1571 = vmatpush1.msra.mxu0 %v1547
      %1572 = vmatprep.subr.mxu0 %v1546
      %1573 = vmatpush1.msra.mxu0 %v1545
      %1574 = vmatprep.subr.mxu0 %v1544
      %1575 = vmatpush1.msra.mxu0 %v1543
      %1576 = vmatprep.subr.mxu0 %v1542
      %1577 = vmatpush1.msra.mxu0 %v1541
      %1578 = vmatprep.subr.mxu0 %v1540
      %1579 = vmatpush1.msra.mxu0 %v1539
      %1580 = vmatprep.subr.mxu0 %v1538
      %1581 = vmatpush1.msra.mxu0 %v1537
      %1582 = vmatprep.subr.mxu0 %v1536
      %1583 = vmatpush1.msra.mxu0 %v1535
      %1584 = vmatprep.subr.mxu0 %v1534
      %1585 = vmatpush1.msra.mxu0 %v1533
      %1586 = vmatprep.subr.mxu0 %v1532
      %1587 = vmatpush1.msra.mxu0 %v1531
      %1588 = vmatprep.subr.mxu0 %v1530
      %1589 = vmatpush1.msra.mxu0 %v1529
      %1590 = vmatprep.subr.mxu0 %v1528
      %1591 = vmatpush1.msra.mxu0 %v1527
      %1592 = vmatprep.subr.mxu0 %v1526
      %1593 = vmatpush1.msra.mxu0 %v1525
      %1594 = vmatprep.subr.mxu0 %v1524
      %1595 = vmatpush1.msra.mxu0 %v1523
      %1596 = vmatprep.subr.mxu0 %v1522
      %1597 = vmatpush1.msra.mxu0 %v1521
      %1598 = vmatprep.subr.mxu0 0.0
      %1599 = vmatpush2.msra.mxu0 0.0
      %1600 = vmatprep.subr.mxu0 0.0
      %1601 = vmatpush2.msra.mxu0 0.0
      %1602 = vmatprep.subr.mxu0 0.0
      %1603 = vmatpush2.msra.mxu0 0.0
      %1604 = vmatprep.subr.mxu0 0.0
      %1605 = vmatpush2.msra.mxu0 0.0
      %1606 = vmatprep.subr.mxu0 0.0
      %1607 = vmatpush2.msra.mxu0 0.0
      %1608 = vmatprep.subr.mxu0 0.0
      %1609 = vmatpush2.msra.mxu0 0.0
      %1610 = vmatprep.subr.mxu0 0.0
      %1611 = vmatpush2.msra.mxu0 0.0
      %1612 = vmatprep.subr.mxu0 0.0
      %1613 = vmatpush2.msra.mxu0 0.0
      %1614 = vmatprep.subr.mxu0 0.0
      %1615 = vmatpush2.msra.mxu0 0.0
      %1616 = vmatprep.subr.mxu0 0.0
      %1617 = vmatpush2.msra.mxu0 0.0
      %1618 = vmatprep.subr.mxu0 0.0
      %1619 = vmatpush2.msra.mxu0 0.0
      %1620 = vmatprep.subr.mxu0 0.0
      %1621 = vmatpush2.msra.mxu0 0.0
      %1622 = vmatprep.subr.mxu0 0.0
      %1623 = vmatpush2.msra.mxu0 0.0
      %1624 = vmatprep.subr.mxu0 0.0
      %1625 = vmatpush2.msra.mxu0 0.0
      %1626 = vmatprep.subr.mxu0 0.0
      %1627 = vmatpush2.msra.mxu0 0.0
      %1628 = vmatprep.subr.mxu0 0.0
      %1629 = vmatpush2.msra.mxu0 0.0
      %1630 = vmatprep.mubr.f32.mxu0 0.0
      %1631 = vmatmul.mubr.f32.gmra.mxu0 %v1381
      %v1632 = vpop.f32.mrf.mxu0
      %v1633 = vadd.f32 %v1559, %v1632
      %v1634 = vpop.f32.mrf.mxu0
      %v1635 = vadd.f32 %v1563, %v1634
      %1636 = vmatprep.mubr.f32.mxu0 0.0
      %1637 = vmatmul.mubr.f32.gmra.mxu0 %v1382
      %v1638 = vpop.f32.mrf.mxu0
      %v1639 = vadd.f32 %v1559, %v1638
      %v1640 = vpop.f32.mrf.mxu0
      %v1641 = vadd.f32 %v1563, %v1640
      %1642 = vdwg.mxu0
      %v1643 = vxor.u32 %v1635, 2147483648
      %v1644 = vxor.u32 %v1641, 2147483648
      %v1645 = vmul.f32 %v1643, 1.442695
      %v1646 = vpow.pop %v1645
      %v1647 = vmul.f32 %v1644, 1.442695
      %v1648 = vpow.pop %v1647
      %v1649 = vadd.f32 %v1646, 1.0
      %v1650 = vadd.f32 %v1648, 1.0
      %v1651 = vrcp.pop %v1649
      %v1652 = vmul.f32 1.0, %v1651
      %v1653 = vrcp.pop %v1650
      %v1654 = vmul.f32 1.0, %v1653
      %v1655 = vmul.f32 %v1633, %v1652
      %v1656 = vmul.f32 %v1639, %v1654
      %v1657 = vld [vmem:[%s6] sm:$0xff]
      %v1658 = vld [vmem:[%s6 + $0x8] sm:$0xff]
      %v1659 = vld [vmem:[%s6 + $0x10] sm:$0xff]
      %v1660 = vld [vmem:[%s6 + $0x18] sm:$0xff]
      %v1661 = vld [vmem:[%s6 + $0x20] sm:$0xff]
      %v1662 = vld [vmem:[%s6 + $0x28] sm:$0xff]
      %v1663 = vld [vmem:[%s6 + $0x30] sm:$0xff]
      %v1664 = vld [vmem:[%s6 + $0x38] sm:$0xff]
      %v1665 = vld [vmem:[%s6 + $0x40] sm:$0xff]
      %v1666 = vld [vmem:[%s6 + $0x48] sm:$0xff]
      %v1667 = vld [vmem:[%s6 + $0x50] sm:$0xff]
      %v1668 = vld [vmem:[%s6 + $0x58] sm:$0xff]
      %v1669 = vld [vmem:[%s6 + $0x60] sm:$0xff]
      %v1670 = vld [vmem:[%s6 + $0x68] sm:$0xff]
      %v1671 = vld [vmem:[%s6 + $0x70] sm:$0xff]
      %v1672 = vld [vmem:[%s6 + $0x78] sm:$0xff]
      %v1673 = vld [vmem:[%s7] sm:$0xff]
      %v1674 = vld [vmem:[%s7 + $0x8] sm:$0xff]
      %v1675 = vld [vmem:[%s7 + $0x10] sm:$0xff]
      %v1676 = vld [vmem:[%s7 + $0x18] sm:$0xff]
      %v1677 = vld [vmem:[%s7 + $0x20] sm:$0xff]
      %v1678 = vld [vmem:[%s7 + $0x28] sm:$0xff]
      %v1679 = vld [vmem:[%s7 + $0x30] sm:$0xff]
      %v1680 = vld [vmem:[%s7 + $0x38] sm:$0xff]
      %v1681 = vld [vmem:[%s7 + $0x40] sm:$0xff]
      %v1682 = vld [vmem:[%s7 + $0x48] sm:$0xff]
      %v1683 = vld [vmem:[%s7 + $0x50] sm:$0xff]
      %v1684 = vld [vmem:[%s7 + $0x58] sm:$0xff]
      %v1685 = vld [vmem:[%s7 + $0x60] sm:$0xff]
      %v1686 = vld [vmem:[%s7 + $0x68] sm:$0xff]
      %v1687 = vld [vmem:[%s7 + $0x70] sm:$0xff]
      %v1688 = vld [vmem:[%s7 + $0x78] sm:$0xff]
      %1689 = vmatprep.subr.mxu0 0.0
      %1690 = vmatpush1.msra.mxu0 %v1688
      %1691 = vmatprep.subr.mxu0 0.0
      %1692 = vmatpush1.msra.mxu0 %v1687
      %1693 = vmatprep.subr.mxu0 0.0
      %1694 = vmatpush1.msra.mxu0 %v1686
      %1695 = vmatprep.subr.mxu0 0.0
      %1696 = vmatpush1.msra.mxu0 %v1685
      %1697 = vmatprep.subr.mxu0 0.0
      %1698 = vmatpush1.msra.mxu0 %v1684
      %1699 = vmatprep.subr.mxu0 0.0
      %1700 = vmatpush1.msra.mxu0 %v1683
      %1701 = vmatprep.subr.mxu0 0.0
      %1702 = vmatpush1.msra.mxu0 %v1682
      %1703 = vmatprep.subr.mxu0 0.0
      %1704 = vmatpush1.msra.mxu0 %v1681
      %1705 = vmatprep.subr.mxu0 0.0
      %1706 = vmatpush1.msra.mxu0 %v1680
      %1707 = vmatprep.subr.mxu0 0.0
      %1708 = vmatpush1.msra.mxu0 %v1679
      %1709 = vmatprep.subr.mxu0 0.0
      %1710 = vmatpush1.msra.mxu0 %v1678
      %1711 = vmatprep.subr.mxu0 0.0
      %1712 = vmatpush1.msra.mxu0 %v1677
      %1713 = vmatprep.subr.mxu0 0.0
      %1714 = vmatpush1.msra.mxu0 %v1676
      %1715 = vmatprep.subr.mxu0 0.0
      %1716 = vmatpush1.msra.mxu0 %v1675
      %1717 = vmatprep.subr.mxu0 0.0
      %1718 = vmatpush1.msra.mxu0 %v1674
      %1719 = vmatprep.subr.mxu0 0.0
      %1720 = vmatpush1.msra.mxu0 %v1673
      %1721 = vmatprep.subr.mxu0 0.0
      %1722 = vmatpush2.msra.mxu0 0.0
      %1723 = vmatprep.subr.mxu0 0.0
      %1724 = vmatpush2.msra.mxu0 0.0
      %1725 = vmatprep.subr.mxu0 0.0
      %1726 = vmatpush2.msra.mxu0 0.0
      %1727 = vmatprep.subr.mxu0 0.0
      %1728 = vmatpush2.msra.mxu0 0.0
      %1729 = vmatprep.subr.mxu0 0.0
      %1730 = vmatpush2.msra.mxu0 0.0
      %1731 = vmatprep.subr.mxu0 0.0
      %1732 = vmatpush2.msra.mxu0 0.0
      %1733 = vmatprep.subr.mxu0 0.0
      %1734 = vmatpush2.msra.mxu0 0.0
      %1735 = vmatprep.subr.mxu0 0.0
      %1736 = vmatpush2.msra.mxu0 0.0
      %1737 = vmatprep.subr.mxu0 0.0
      %1738 = vmatpush2.msra.mxu0 0.0
      %1739 = vmatprep.subr.mxu0 0.0
      %1740 = vmatpush2.msra.mxu0 0.0
      %1741 = vmatprep.subr.mxu0 0.0
      %1742 = vmatpush2.msra.mxu0 0.0
      %1743 = vmatprep.subr.mxu0 0.0
      %1744 = vmatpush2.msra.mxu0 0.0
      %1745 = vmatprep.subr.mxu0 0.0
      %1746 = vmatpush2.msra.mxu0 0.0
      %1747 = vmatprep.subr.mxu0 0.0
      %1748 = vmatpush2.msra.mxu0 0.0
      %1749 = vmatprep.subr.mxu0 0.0
      %1750 = vmatpush2.msra.mxu0 0.0
      %1751 = vmatprep.subr.mxu0 0.0
      %1752 = vmatpush2.msra.mxu0 0.0
      %1753 = vmatprep.mubr.f32.mxu0 0.0
      %1754 = vmatmul.mubr.f32.gmra.mxu0 %v1655
      %v1755 = vpop.f32.mrf.mxu0
      %v1756 = vadd.f32 0.0, %v1755
      %v1757 = vpop.f32.mrf.mxu0
      %1758 = vmatprep.mubr.f32.mxu0 0.0
      %1759 = vmatmul.mubr.f32.gmra.mxu0 %v1656
      %v1760 = vpop.f32.mrf.mxu0
      %v1761 = vadd.f32 0.0, %v1760
      %v1762 = vpop.f32.mrf.mxu0
      %1763 = vdwg.mxu0
      %1764 = vmatprep.subr.mxu0 0.0
      %1765 = vmatpush1.msra.mxu0 %v1672
      %1766 = vmatprep.subr.mxu0 0.0
      %1767 = vmatpush1.msra.mxu0 %v1671
      %1768 = vmatprep.subr.mxu0 0.0
      %1769 = vmatpush1.msra.mxu0 %v1670
      %1770 = vmatprep.subr.mxu0 0.0
      %1771 = vmatpush1.msra.mxu0 %v1669
      %1772 = vmatprep.subr.mxu0 0.0
      %1773 = vmatpush1.msra.mxu0 %v1668
      %1774 = vmatprep.subr.mxu0 0.0
      %1775 = vmatpush1.msra.mxu0 %v1667
      %1776 = vmatprep.subr.mxu0 0.0
      %1777 = vmatpush1.msra.mxu0 %v1666
      %1778 = vmatprep.subr.mxu0 0.0
      %1779 = vmatpush1.msra.mxu0 %v1665
      %1780 = vmatprep.subr.mxu0 0.0
      %1781 = vmatpush1.msra.mxu0 %v1664
      %1782 = vmatprep.subr.mxu0 0.0
      %1783 = vmatpush1.msra.mxu0 %v1663
      %1784 = vmatprep.subr.mxu0 0.0
      %1785 = vmatpush1.msra.mxu0 %v1662
      %1786 = vmatprep.subr.mxu0 0.0
      %1787 = vmatpush1.msra.mxu0 %v1661
      %1788 = vmatprep.subr.mxu0 0.0
      %1789 = vmatpush1.msra.mxu0 %v1660
      %1790 = vmatprep.subr.mxu0 0.0
      %1791 = vmatpush1.msra.mxu0 %v1659
      %1792 = vmatprep.subr.mxu0 0.0
      %1793 = vmatpush1.msra.mxu0 %v1658
      %1794 = vmatprep.subr.mxu0 0.0
      %1795 = vmatpush1.msra.mxu0 %v1657
      %1796 = vmatprep.subr.mxu0 0.0
      %1797 = vmatpush2.msra.mxu0 0.0
      %1798 = vmatprep.subr.mxu0 0.0
      %1799 = vmatpush2.msra.mxu0 0.0
      %1800 = vmatprep.subr.mxu0 0.0
      %1801 = vmatpush2.msra.mxu0 0.0
      %1802 = vmatprep.subr.mxu0 0.0
      %1803 = vmatpush2.msra.mxu0 0.0
      %1804 = vmatprep.subr.mxu0 0.0
      %1805 = vmatpush2.msra.mxu0 0.0
      %1806 = vmatprep.subr.mxu0 0.0
      %1807 = vmatpush2.msra.mxu0 0.0
      %1808 = vmatprep.subr.mxu0 0.0
      %1809 = vmatpush2.msra.mxu0 0.0
      %1810 = vmatprep.subr.mxu0 0.0
      %1811 = vmatpush2.msra.mxu0 0.0
      %1812 = vmatprep.subr.mxu0 0.0
      %1813 = vmatpush2.msra.mxu0 0.0
      %1814 = vmatprep.subr.mxu0 0.0
      %1815 = vmatpush2.msra.mxu0 0.0
      %1816 = vmatprep.subr.mxu0 0.0
      %1817 = vmatpush2.msra.mxu0 0.0
      %1818 = vmatprep.subr.mxu0 0.0
      %1819 = vmatpush2.msra.mxu0 0.0
      %1820 = vmatprep.subr.mxu0 0.0
      %1821 = vmatpush2.msra.mxu0 0.0
      %1822 = vmatprep.subr.mxu0 0.0
      %1823 = vmatpush2.msra.mxu0 0.0
      %1824 = vmatprep.subr.mxu0 0.0
      %1825 = vmatpush2.msra.mxu0 0.0
      %1826 = vmatprep.subr.mxu0 0.0
      %1827 = vmatpush2.msra.mxu0 0.0
      %1828 = vmatprep.mubr.f32.mxu0 0.0
      %1829 = vmatmul.mubr.f32.gmra.mxu0 %v1518
      %v1830 = vpop.f32.mrf.mxu0
      %v1831 = vadd.f32 %v1756, %v1830
      %v1832 = vpop.f32.mrf.mxu0
      %1833 = vmatprep.mubr.f32.mxu0 0.0
      %1834 = vmatmul.mubr.f32.gmra.mxu0 %v1519
      %v1835 = vpop.f32.mrf.mxu0
      %v1836 = vadd.f32 %v1761, %v1835
      %v1837 = vpop.f32.mrf.mxu0
      %1838 = vdwg.mxu0
      %v1839 = vld [vmem:[%s8] sm:$0xff]
      %v1840 = vld [vmem:[%s8 + $0x8] sm:$0xff]
      %v1841 = vld [vmem:[%s8 + $0x10] sm:$0xff]
      %v1842 = vld [vmem:[%s8 + $0x18] sm:$0xff]
      %v1843 = vld [vmem:[%s9] sm:$0x1]
      %v1845 = vlaneseq
      %v1846 = vshrl.u32 %v1845, 7
      %v1847 = vsub.s32 0, %v1846
      %v1848 = vrot.slane %v1843, %v1847
      %vm1850 = vcmask 261120
      %v1852 = vsel %vm1850, %v1831, 0
      %v1855 = vsel %vm1850, %v1836, 0
      %1857 = vmatprep.subr.mxu0 0.0
      %1858 = vmatpush1.msra.mxu0 0.0
      %1859 = vmatprep.subr.mxu0 0.0
      %1860 = vmatpush1.msra.mxu0 0.0
      %1861 = vmatprep.subr.mxu0 0.0
      %1862 = vmatpush1.msra.mxu0 0.0
      %1863 = vmatprep.subr.mxu0 0.0
      %1864 = vmatpush1.msra.mxu0 0.0
      %1865 = vmatprep.subr.mxu0 0.0
      %1866 = vmatpush1.msra.mxu0 0.0
      %1867 = vmatprep.subr.mxu0 0.0
      %1868 = vmatpush1.msra.mxu0 0.0
      %1869 = vmatprep.subr.mxu0 0.0
      %1870 = vmatpush1.msra.mxu0 0.0
      %1871 = vmatprep.subr.mxu0 0.0
      %1872 = vmatpush1.msra.mxu0 0.0
      %1873 = vmatprep.subr.mxu0 0.0
      %1874 = vmatpush1.msra.mxu0 0.0
      %1875 = vmatprep.subr.mxu0 0.0
      %1876 = vmatpush1.msra.mxu0 0.0
      %1877 = vmatprep.subr.mxu0 0.0
      %1878 = vmatpush1.msra.mxu0 0.0
      %1879 = vmatprep.subr.mxu0 0.0
      %1880 = vmatpush1.msra.mxu0 0.0
      %1881 = vmatprep.subr.mxu0 0.0
      %1882 = vmatpush1.msra.mxu0 %v1842
      %1883 = vmatprep.subr.mxu0 0.0
      %1884 = vmatpush1.msra.mxu0 %v1841
      %1885 = vmatprep.subr.mxu0 0.0
      %1886 = vmatpush1.msra.mxu0 %v1840
      %1887 = vmatprep.subr.mxu0 0.0
      %1888 = vmatpush1.msra.mxu0 %v1839
      %1889 = vmatprep.subr.mxu0 0.0
      %1890 = vmatpush2.msra.mxu0 0.0
      %1891 = vmatprep.subr.mxu0 0.0
      %1892 = vmatpush2.msra.mxu0 0.0
      %1893 = vmatprep.subr.mxu0 0.0
      %1894 = vmatpush2.msra.mxu0 0.0
      %1895 = vmatprep.subr.mxu0 0.0
      %1896 = vmatpush2.msra.mxu0 0.0
      %1897 = vmatprep.subr.mxu0 0.0
      %1898 = vmatpush2.msra.mxu0 0.0
      %1899 = vmatprep.subr.mxu0 0.0
      %1900 = vmatpush2.msra.mxu0 0.0
      %1901 = vmatprep.subr.mxu0 0.0
      %1902 = vmatpush2.msra.mxu0 0.0
      %1903 = vmatprep.subr.mxu0 0.0
      %1904 = vmatpush2.msra.mxu0 0.0
      %1905 = vmatprep.subr.mxu0 0.0
      %1906 = vmatpush2.msra.mxu0 0.0
      %1907 = vmatprep.subr.mxu0 0.0
      %1908 = vmatpush2.msra.mxu0 0.0
      %1909 = vmatprep.subr.mxu0 0.0
      %1910 = vmatpush2.msra.mxu0 0.0
      %1911 = vmatprep.subr.mxu0 0.0
      %1912 = vmatpush2.msra.mxu0 0.0
      %1913 = vmatprep.subr.mxu0 0.0
      %1914 = vmatpush2.msra.mxu0 0.0
      %1915 = vmatprep.subr.mxu0 0.0
      %1916 = vmatpush2.msra.mxu0 0.0
      %1917 = vmatprep.subr.mxu0 0.0
      %1918 = vmatpush2.msra.mxu0 0.0
      %1919 = vmatprep.subr.mxu0 0.0
      %1920 = vmatpush2.msra.mxu0 0.0
      %1921 = vmatprep.mubr.f32.mxu0 0.0
      %1922 = vmatmul.mubr.f32.gmra.mxu0 %v1852
      %v1923 = vpop.f32.mrf.mxu0
      %v1924 = vadd.f32 %v1848, %v1923
      %v1925 = vpop.f32.mrf.mxu0
      %1926 = vmatprep.mubr.f32.mxu0 0.0
      %1927 = vmatmul.mubr.f32.gmra.mxu0 %v1855
      %v1928 = vpop.f32.mrf.mxu0
      %v1929 = vadd.f32 %v1848, %v1928
      %v1930 = vpop.f32.mrf.mxu0
      %1931 = vdwg.mxu0
      %v1932 = vxor.u32 %v1924, 2147483648
      %v1933 = vxor.u32 %v1929, 2147483648
      %v1934 = vmul.f32 %v1932, 1.442695
      %v1935 = vpow.pop %v1934
      %v1936 = vmul.f32 %v1933, 1.442695
      %v1937 = vpow.pop %v1936
      %v1938 = vadd.f32 %v1935, 1.0
      %v1939 = vadd.f32 %v1937, 1.0
      %v1940 = vrcp.pop %v1938
      %v1941 = vmul.f32 1.0, %v1940
      %v1942 = vrcp.pop %v1939
      %v1943 = vmul.f32 1.0, %v1942
      %v1944 = vld [vmem:[%s10] sm:$0xff]
      %v1945 = vld [vmem:[%s10 + $0x8] sm:$0xff]
      %v1946 = vld [vmem:[%s10 + $0x10] sm:$0xff]
      %v1947 = vld [vmem:[%s10 + $0x18] sm:$0xff]
      %v1948 = vld [vmem:[%s11] sm:$0x1]
      %v1950 = vlaneseq
      %v1951 = vshrl.u32 %v1950, 7
      %v1952 = vsub.s32 0, %v1951
      %v1953 = vrot.slane %v1948, %v1952
      %v1956 = vsel %vm1850, %v1941, 0
      %v1959 = vsel %vm1850, %v1943, 0
      %1961 = vmatprep.subr.mxu0 0.0
      %1962 = vmatpush1.msra.mxu0 0.0
      %1963 = vmatprep.subr.mxu0 0.0
      %1964 = vmatpush1.msra.mxu0 0.0
      %1965 = vmatprep.subr.mxu0 0.0
      %1966 = vmatpush1.msra.mxu0 0.0
      %1967 = vmatprep.subr.mxu0 0.0
      %1968 = vmatpush1.msra.mxu0 0.0
      %1969 = vmatprep.subr.mxu0 0.0
      %1970 = vmatpush1.msra.mxu0 0.0
      %1971 = vmatprep.subr.mxu0 0.0
      %1972 = vmatpush1.msra.mxu0 0.0
      %1973 = vmatprep.subr.mxu0 0.0
      %1974 = vmatpush1.msra.mxu0 0.0
      %1975 = vmatprep.subr.mxu0 0.0
      %1976 = vmatpush1.msra.mxu0 0.0
      %1977 = vmatprep.subr.mxu0 0.0
      %1978 = vmatpush1.msra.mxu0 0.0
      %1979 = vmatprep.subr.mxu0 0.0
      %1980 = vmatpush1.msra.mxu0 0.0
      %1981 = vmatprep.subr.mxu0 0.0
      %1982 = vmatpush1.msra.mxu0 0.0
      %1983 = vmatprep.subr.mxu0 0.0
      %1984 = vmatpush1.msra.mxu0 0.0
      %1985 = vmatprep.subr.mxu0 0.0
      %1986 = vmatpush1.msra.mxu0 %v1947
      %1987 = vmatprep.subr.mxu0 0.0
      %1988 = vmatpush1.msra.mxu0 %v1946
      %1989 = vmatprep.subr.mxu0 0.0
      %1990 = vmatpush1.msra.mxu0 %v1945
      %1991 = vmatprep.subr.mxu0 0.0
      %1992 = vmatpush1.msra.mxu0 %v1944
      %1993 = vmatprep.subr.mxu0 0.0
      %1994 = vmatpush2.msra.mxu0 0.0
      %1995 = vmatprep.subr.mxu0 0.0
      %1996 = vmatpush2.msra.mxu0 0.0
      %1997 = vmatprep.subr.mxu0 0.0
      %1998 = vmatpush2.msra.mxu0 0.0
      %1999 = vmatprep.subr.mxu0 0.0
      %2000 = vmatpush2.msra.mxu0 0.0
      %2001 = vmatprep.subr.mxu0 0.0
      %2002 = vmatpush2.msra.mxu0 0.0
      %2003 = vmatprep.subr.mxu0 0.0
      %2004 = vmatpush2.msra.mxu0 0.0
      %2005 = vmatprep.subr.mxu0 0.0
      %2006 = vmatpush2.msra.mxu0 0.0
      %2007 = vmatprep.subr.mxu0 0.0
      %2008 = vmatpush2.msra.mxu0 0.0
      %2009 = vmatprep.subr.mxu0 0.0
      %2010 = vmatpush2.msra.mxu0 0.0
      %2011 = vmatprep.subr.mxu0 0.0
      %2012 = vmatpush2.msra.mxu0 0.0
      %2013 = vmatprep.subr.mxu0 0.0
      %2014 = vmatpush2.msra.mxu0 0.0
      %2015 = vmatprep.subr.mxu0 0.0
      %2016 = vmatpush2.msra.mxu0 0.0
      %2017 = vmatprep.subr.mxu0 0.0
      %2018 = vmatpush2.msra.mxu0 0.0
      %2019 = vmatprep.subr.mxu0 0.0
      %2020 = vmatpush2.msra.mxu0 0.0
      %2021 = vmatprep.subr.mxu0 0.0
      %2022 = vmatpush2.msra.mxu0 0.0
      %2023 = vmatprep.subr.mxu0 0.0
      %2024 = vmatpush2.msra.mxu0 0.0
      %2025 = vmatprep.mubr.f32.mxu0 0.0
      %2026 = vmatmul.mubr.f32.gmra.mxu0 %v1956
      %v2027 = vpop.f32.mrf.mxu0
      %v2028 = vadd.f32 %v1953, %v2027
      %v2029 = vpop.f32.mrf.mxu0
      %2030 = vmatprep.mubr.f32.mxu0 0.0
      %2031 = vmatmul.mubr.f32.gmra.mxu0 %v1959
      %v2032 = vpop.f32.mrf.mxu0
      %v2033 = vadd.f32 %v1953, %v2032
      %v2034 = vpop.f32.mrf.mxu0
      %2035 = vdwg.mxu0
      %v2036 = vld [vmem:[%s14] sm:$0xff]
      %v2037 = vld [vmem:[%s15] sm:$0x1]
      %v2039 = vlaneseq
      %v2040 = vshrl.u32 %v2039, 7
      %v2041 = vsub.s32 0, %v2040
      %v2042 = vrot.slane %v2037, %v2041
      %v2045 = vsel %vm709, %v562, 0
      %v2048 = vsel %vm709, %v563, 0
      %2050 = vmatprep.subr.mxu0 0.0
      %2051 = vmatpush1.msra.mxu0 0.0
      %2052 = vmatprep.subr.mxu0 0.0
      %2053 = vmatpush1.msra.mxu0 0.0
      %2054 = vmatprep.subr.mxu0 0.0
      %2055 = vmatpush1.msra.mxu0 0.0
      %2056 = vmatprep.subr.mxu0 0.0
      %2057 = vmatpush1.msra.mxu0 0.0
      %2058 = vmatprep.subr.mxu0 0.0
      %2059 = vmatpush1.msra.mxu0 0.0
      %2060 = vmatprep.subr.mxu0 0.0
      %2061 = vmatpush1.msra.mxu0 0.0
      %2062 = vmatprep.subr.mxu0 0.0
      %2063 = vmatpush1.msra.mxu0 0.0
      %2064 = vmatprep.subr.mxu0 0.0
      %2065 = vmatpush1.msra.mxu0 0.0
      %2066 = vmatprep.subr.mxu0 0.0
      %2067 = vmatpush1.msra.mxu0 0.0
      %2068 = vmatprep.subr.mxu0 0.0
      %2069 = vmatpush1.msra.mxu0 0.0
      %2070 = vmatprep.subr.mxu0 0.0
      %2071 = vmatpush1.msra.mxu0 0.0
      %2072 = vmatprep.subr.mxu0 0.0
      %2073 = vmatpush1.msra.mxu0 0.0
      %2074 = vmatprep.subr.mxu0 0.0
      %2075 = vmatpush1.msra.mxu0 0.0
      %2076 = vmatprep.subr.mxu0 0.0
      %2077 = vmatpush1.msra.mxu0 0.0
      %2078 = vmatprep.subr.mxu0 0.0
      %2079 = vmatpush1.msra.mxu0 0.0
      %2080 = vmatprep.subr.mxu0 0.0
      %2081 = vmatpush1.msra.mxu0 %v2036
      %2082 = vmatprep.subr.mxu0 0.0
      %2083 = vmatpush2.msra.mxu0 0.0
      %2084 = vmatprep.subr.mxu0 0.0
      %2085 = vmatpush2.msra.mxu0 0.0
      %2086 = vmatprep.subr.mxu0 0.0
      %2087 = vmatpush2.msra.mxu0 0.0
      %2088 = vmatprep.subr.mxu0 0.0
      %2089 = vmatpush2.msra.mxu0 0.0
      %2090 = vmatprep.subr.mxu0 0.0
      %2091 = vmatpush2.msra.mxu0 0.0
      %2092 = vmatprep.subr.mxu0 0.0
      %2093 = vmatpush2.msra.mxu0 0.0
      %2094 = vmatprep.subr.mxu0 0.0
      %2095 = vmatpush2.msra.mxu0 0.0
      %2096 = vmatprep.subr.mxu0 0.0
      %2097 = vmatpush2.msra.mxu0 0.0
      %2098 = vmatprep.subr.mxu0 0.0
      %2099 = vmatpush2.msra.mxu0 0.0
      %2100 = vmatprep.subr.mxu0 0.0
      %2101 = vmatpush2.msra.mxu0 0.0
      %2102 = vmatprep.subr.mxu0 0.0
      %2103 = vmatpush2.msra.mxu0 0.0
      %2104 = vmatprep.subr.mxu0 0.0
      %2105 = vmatpush2.msra.mxu0 0.0
      %2106 = vmatprep.subr.mxu0 0.0
      %2107 = vmatpush2.msra.mxu0 0.0
      %2108 = vmatprep.subr.mxu0 0.0
      %2109 = vmatpush2.msra.mxu0 0.0
      %2110 = vmatprep.subr.mxu0 0.0
      %2111 = vmatpush2.msra.mxu0 0.0
      %2112 = vmatprep.subr.mxu0 0.0
      %2113 = vmatpush2.msra.mxu0 0.0
      %2114 = vmatprep.mubr.f32.mxu0 0.0
      %2115 = vmatmul.mubr.f32.gmra.mxu0 %v2045
      %v2116 = vpop.f32.mrf.mxu0
      %v2117 = vadd.f32 %v2042, %v2116
      %v2118 = vpop.f32.mrf.mxu0
      %2119 = vmatprep.mubr.f32.mxu0 0.0
      %2120 = vmatmul.mubr.f32.gmra.mxu0 %v2048
      %v2121 = vpop.f32.mrf.mxu0
      %v2122 = vadd.f32 %v2042, %v2121
      %v2123 = vpop.f32.mrf.mxu0
      %2124 = vdwg.mxu0
      %v2125 = vld [vmem:[%s12] sm:$0xff]
      %v2126 = vld [vmem:[%s12 + $0x8] sm:$0xff]
      %v2127 = vld [vmem:[%s12 + $0x10] sm:$0xff]
      %v2128 = vld [vmem:[%s12 + $0x18] sm:$0xff]
      %v2129 = vld [vmem:[%s13] sm:$0x1]
      %v2131 = vlaneseq
      %v2132 = vshrl.u32 %v2131, 7
      %v2133 = vsub.s32 0, %v2132
      %v2134 = vrot.slane %v2129, %v2133
      %2136 = vmatprep.subr.mxu0 0.0
      %2137 = vmatpush1.msra.mxu0 0.0
      %2138 = vmatprep.subr.mxu0 0.0
      %2139 = vmatpush1.msra.mxu0 0.0
      %2140 = vmatprep.subr.mxu0 0.0
      %2141 = vmatpush1.msra.mxu0 0.0
      %2142 = vmatprep.subr.mxu0 0.0
      %2143 = vmatpush1.msra.mxu0 0.0
      %2144 = vmatprep.subr.mxu0 0.0
      %2145 = vmatpush1.msra.mxu0 0.0
      %2146 = vmatprep.subr.mxu0 0.0
      %2147 = vmatpush1.msra.mxu0 0.0
      %2148 = vmatprep.subr.mxu0 0.0
      %2149 = vmatpush1.msra.mxu0 0.0
      %2150 = vmatprep.subr.mxu0 0.0
      %2151 = vmatpush1.msra.mxu0 0.0
      %2152 = vmatprep.subr.mxu0 0.0
      %2153 = vmatpush1.msra.mxu0 0.0
      %2154 = vmatprep.subr.mxu0 0.0
      %2155 = vmatpush1.msra.mxu0 0.0
      %2156 = vmatprep.subr.mxu0 0.0
      %2157 = vmatpush1.msra.mxu0 0.0
      %2158 = vmatprep.subr.mxu0 0.0
      %2159 = vmatpush1.msra.mxu0 0.0
      %2160 = vmatprep.subr.mxu0 0.0
      %2161 = vmatpush1.msra.mxu0 %v2128
      %2162 = vmatprep.subr.mxu0 0.0
      %2163 = vmatpush1.msra.mxu0 %v2127
      %2164 = vmatprep.subr.mxu0 0.0
      %2165 = vmatpush1.msra.mxu0 %v2126
      %2166 = vmatprep.subr.mxu0 0.0
      %2167 = vmatpush1.msra.mxu0 %v2125
      %2168 = vmatprep.subr.mxu0 0.0
      %2169 = vmatpush2.msra.mxu0 0.0
      %2170 = vmatprep.subr.mxu0 0.0
      %2171 = vmatpush2.msra.mxu0 0.0
      %2172 = vmatprep.subr.mxu0 0.0
      %2173 = vmatpush2.msra.mxu0 0.0
      %2174 = vmatprep.subr.mxu0 0.0
      %2175 = vmatpush2.msra.mxu0 0.0
      %2176 = vmatprep.subr.mxu0 0.0
      %2177 = vmatpush2.msra.mxu0 0.0
      %2178 = vmatprep.subr.mxu0 0.0
      %2179 = vmatpush2.msra.mxu0 0.0
      %2180 = vmatprep.subr.mxu0 0.0
      %2181 = vmatpush2.msra.mxu0 0.0
      %2182 = vmatprep.subr.mxu0 0.0
      %2183 = vmatpush2.msra.mxu0 0.0
      %2184 = vmatprep.subr.mxu0 0.0
      %2185 = vmatpush2.msra.mxu0 0.0
      %2186 = vmatprep.subr.mxu0 0.0
      %2187 = vmatpush2.msra.mxu0 0.0
      %2188 = vmatprep.subr.mxu0 0.0
      %2189 = vmatpush2.msra.mxu0 0.0
      %2190 = vmatprep.subr.mxu0 0.0
      %2191 = vmatpush2.msra.mxu0 0.0
      %2192 = vmatprep.subr.mxu0 0.0
      %2193 = vmatpush2.msra.mxu0 0.0
      %2194 = vmatprep.subr.mxu0 0.0
      %2195 = vmatpush2.msra.mxu0 0.0
      %2196 = vmatprep.subr.mxu0 0.0
      %2197 = vmatpush2.msra.mxu0 0.0
      %2198 = vmatprep.subr.mxu0 0.0
      %2199 = vmatpush2.msra.mxu0 0.0
      %2200 = vmatprep.mubr.f32.mxu0 0.0
      %2201 = vmatmul.mubr.f32.gmra.mxu0 %v1852
      %v2202 = vpop.f32.mrf.mxu0
      %v2203 = vadd.f32 %v2134, %v2202
      %v2204 = vpop.f32.mrf.mxu0
      %2205 = vmatprep.mubr.f32.mxu0 0.0
      %2206 = vmatmul.mubr.f32.gmra.mxu0 %v1855
      %v2207 = vpop.f32.mrf.mxu0
      %v2208 = vadd.f32 %v2134, %v2207
      %v2209 = vpop.f32.mrf.mxu0
      %2210 = vdwg.mxu0
      %2211 = vst.msk [vmem:[%s556] sm:$0xff] %vm709, %v2028
      %2212 = vst.msk [vmem:[%s556 + $0x8] sm:$0xff] %vm709, %v2033
      %v2213 = vsub.f32 %v2203, %v2117
      %v2214 = vsub.f32 %v2208, %v2122
      %v2215 = vxor.u32 %v2213, 2147483648
      %v2216 = vxor.u32 %v2214, 2147483648
      %v2217 = vmul.f32 %v2215, 1.442695
      %v2218 = vpow.pop %v2217
      %v2219 = vmul.f32 %v2216, 1.442695
      %v2220 = vpow.pop %v2219
      %v2221 = vadd.f32 %v2218, 1.0
      %v2222 = vadd.f32 %v2220, 1.0
      %v2223 = vrcp.pop %v2221
      %v2224 = vmul.f32 1.0, %v2223
      %v2225 = vrcp.pop %v2222
      %v2226 = vmul.f32 1.0, %v2225
      %2227 = vst.msk [vmem:[%s561] sm:$0xff] %vm709, %v2224
      %2228 = vst.msk [vmem:[%s561 + $0x8] sm:$0xff] %vm709, %v2226
      %p2229 = scmp.lt.s32.totalorder %s29, 1
      %s2230 = scalar_select %p2229, %s29, 1
      %s2231 = smul.addr %s2230, 2
      %s2232 = smul.addr %s2231, 8
      %s2233 = scalar_lea.vmem %s16, %s2232
      %p2234 = scmp.lt.s32.totalorder %s29, 1
      %s2235 = scalar_select %p2234, %s29, 1
      %s2236 = smul.addr %s2235, 2
      %s2237 = smul.addr %s2236, 8
      %s2238 = scalar_lea.vmem %s17, %s2237
      // Predicated region
      $region85: #{stock_block_forward.1} parent=83 // pred_check
        %p2239 = pneg %p388
      $region86: #{stock_block_forward.1} parent=83 // pred_check_branch
        %2241 = sbr.rel (%p2239) target = $region88
      $region87: #{stock_block_forward.1} parent=83 // pred_region
        _
      $region88: #{stock_block_forward.1} parent=83 // pred_fallthru
        _
      // Predicated region
      $region89: #{stock_block_forward.1} parent=83 // pred_check
        %p2242 = pneg %p414
      $region90: #{stock_block_forward.1} parent=83 // pred_check_branch
        %2244 = sbr.rel (%p2242) target = $region92
      $region91: #{stock_block_forward.1} parent=83 // pred_region
        _
      $region92: #{stock_block_forward.1} parent=83 // pred_fallthru
        _
    $region84: #{stock_block_forward.1} parent=5 // pred_fallthru
      _
    %p2245 = scmp.le.s32.totalorder 2, %s24
    // Predicated region
    $region93: #{stock_block_forward.1} parent=5 // pred_check
      %p2246 = pneg %p2245
    $region94: #{stock_block_forward.1} parent=5 // pred_check_branch
      %2248 = sbr.rel (%p2246) target = $region96
    $region95: #{stock_block_forward.1} parent=5 // pred_region
      %s2249 = ssub.s32 %s24, 2
      // Predicated region
      $region97: #{stock_block_forward.1} parent=95 // pred_check
        %p2250 = pneg %p394
      $region98: #{stock_block_forward.1} parent=95 // pred_check_branch
        %2252 = sbr.rel (%p2250) target = $region100
      $region99: #{stock_block_forward.1} parent=95 // pred_region
        %p2253 = scmp.lt.s32.totalorder %s30, 1
        %s2254 = scalar_select %p2253, %s30, 1
        %s2255 = smul.addr %s2254, 2
        %s2256 = smul.addr %s2255, 8
        %s2257 = scalar_lea.vmem %s16, %s2256
      $region100: #{stock_block_forward.1} parent=95 // pred_fallthru
        _
      // Predicated region
      $region101: #{stock_block_forward.1} parent=95 // pred_check
        %p2258 = pneg %p420
      $region102: #{stock_block_forward.1} parent=95 // pred_check_branch
        %2260 = sbr.rel (%p2258) target = $region104
      $region103: #{stock_block_forward.1} parent=95 // pred_region
        %p2261 = scmp.lt.s32.totalorder %s30, 1
        %s2262 = scalar_select %p2261, %s30, 1
        %s2263 = smul.addr %s2262, 2
        %s2264 = smul.addr %s2263, 8
        %s2265 = scalar_lea.vmem %s17, %s2264
      $region104: #{stock_block_forward.1} parent=95 // pred_fallthru
        _
    $region96: #{stock_block_forward.1} parent=5 // pred_fallthru
      _
  $region6: #{stock_block_forward.1} parent=0 // loop_footer
    %s28 = sadd.s32 1, %s24
  $region7: #{stock_block_forward.1} parent=0 // loop_footer_branch
    %23 = sbr.rel target = $region3
  $region8: #{stock_block_forward.1} parent=0 // loop_exit
    _

</llo_original>
